<compile_context>
chip_gen: v5e
topology: v5e:2x2
jax: 0.10.0
libtpu: 0.0.40
codegen_flags: <defaults>
</compile_context>

<pallas_src>
import functools

import jax
import jax.numpy as jnp
from jax.experimental import pallas as pl
from jax.experimental.pallas import tpu as pltpu


def separator_kernel(node_feats_ref, h_node_ref, batch_ref,
                     w_r_ref, b_r_ref, w_g_ref, b_g_ref,
                     out_ref, rhs_ref, *, d):
    step = pl.program_id(1)

    # Start of this split's reduction: zero the resident accumulator block and
    # write the constant columns of the RHS slab (ones column + zero pad) once.
    @pl.when(step == 0)
    def _():
        out_ref[...] = jnp.zeros_like(out_ref)
        rhs_ref[...] = jnp.zeros_like(rhs_ref)
        rhs_ref[:, 2 * d + 1:2 * d + 2] = jnp.ones(
            (rhs_ref.shape[0], 1), jnp.float32)

    # rationale_gnn_node: Linear + ReLU on node features (MXU + VPU).
    x = node_feats_ref[...].astype(jnp.float32)
    x = jnp.dot(x, w_r_ref[...], preferred_element_type=jnp.float32)
    x = jnp.maximum(x + b_r_ref[...], 0.0)                    # [TILE_N, Dr]

    # gate_nn: Linear(Dr -> 1) as VPU multiply + XLU lane reduce (a 1-lane-wide
    # MXU matmul would waste the systolic array).
    gate_logits = jnp.sum(x * w_g_ref[...], axis=-1, keepdims=True) + b_g_ref[...]
    gate = jax.nn.sigmoid(gate_logits)                        # [TILE_N, 1]

    h = h_node_ref[...].astype(jnp.float32)                   # self.nn is None -> identity

    # Update only the dynamic columns of the resident RHS slab.
    rhs_ref[:, 0:d] = gate * h                                # gate * h
    rhs_ref[:, d:2 * d] = h                                   # h  (c_out = this - h_out)
    rhs_ref[:, 2 * d:2 * d + 1] = gate                        # gate

    # One-hot segment matrix for this node tile: [G_pad, TILE_N].  Padded nodes
    # carry an out-of-range graph id, so their row of the one-hot is all zero.
    g_pad = out_ref.shape[0]
    tile_n = h.shape[0]
    graph_iota = jax.lax.broadcasted_iota(jnp.int32, (g_pad, tile_n), 0)
    onehot = (graph_iota == batch_ref[...]).astype(jnp.float32)

    # Single fused segment matmul per tile, accumulated in f32.
    out_ref[...] += jnp.dot(onehot, rhs_ref[...],
                            preferred_element_type=jnp.float32)


def separator_forward(node_feats, h_node, batch, params, num_graphs, *,
                      tile_n=512, num_splits=2, buffer_depth=2,
                      stream_dtype=jnp.float32):
    n_nodes, f = node_feats.shape
    d = h_node.shape[1]
    d_r = params["w_r"].shape[1]

    g_pad = pl.cdiv(num_graphs, 8) * 8          # sublane-pad the graph dim
    c_pad = pl.cdiv(2 * d + 2, 128) * 128       # lane-dense output slab width

    # Pad the node dimension so it splits evenly into num_splits * tile_n chunks;
    # padded nodes get graph id g_pad (never matches any one-hot row).
    chunk = tile_n * num_splits
    n_pad = pl.cdiv(n_nodes, chunk) * chunk
    if n_pad != n_nodes:
        extra = n_pad - n_nodes
        node_feats = jnp.pad(node_feats, ((0, extra), (0, 0)))
        h_node = jnp.pad(h_node, ((0, extra), (0, 0)))
        batch = jnp.pad(batch.astype(jnp.int32), (0, extra),
                        constant_values=g_pad)
    steps_per_split = n_pad // chunk

    # Optionally halve HBM traffic of the dominant streams (kernel computes f32).
    node_feats = node_feats.astype(stream_dtype)
    h_node = h_node.astype(stream_dtype)

    batch_row = batch.reshape(1, n_pad).astype(jnp.int32)
    b_r = params["b_r"].reshape(1, d_r)
    w_g_row = params["w_g"].reshape(1, d_r)      # [Dr, 1] -> [1, Dr] row for VPU path
    b_g = params["b_g"].reshape(1, 1)

    stream_kwargs = {}
    if buffer_depth != 2:
        stream_kwargs["pipeline_mode"] = pl.Buffered(buffer_depth)

    def node_tile(s, i):
        return (s * steps_per_split + i, 0)

    kernel = functools.partial(separator_kernel, d=d)

    slab = pl.pallas_call(
        kernel,
        out_shape=jax.ShapeDtypeStruct((num_splits * g_pad, c_pad), jnp.float32),
        grid_spec=pltpu.PrefetchScalarGridSpec(
            num_scalar_prefetch=0,
            grid=(num_splits, steps_per_split),
            in_specs=[
                pl.BlockSpec((tile_n, f), node_tile, **stream_kwargs),   # node_feats tile
                pl.BlockSpec((tile_n, d), node_tile, **stream_kwargs),   # h_node tile
                pl.BlockSpec((1, tile_n),
                             lambda s, i: (0, s * steps_per_split + i)), # batch ids tile
                pl.BlockSpec((f, d_r), lambda s, i: (0, 0)),             # w_r   (resident)
                pl.BlockSpec((1, d_r), lambda s, i: (0, 0)),             # b_r   (resident)
                pl.BlockSpec((1, d_r), lambda s, i: (0, 0)),             # w_g   (resident)
                pl.BlockSpec((1, 1), lambda s, i: (0, 0)),               # b_g   (resident)
            ],
            out_specs=pl.BlockSpec((g_pad, c_pad), lambda s, i: (s, 0)), # per-split slab
            scratch_shapes=[pltpu.VMEM((tile_n, c_pad), jnp.float32)],   # RHS slab
        ),
        compiler_params=pltpu.CompilerParams(
            dimension_semantics=("parallel", "arbitrary"),   # split axis / node reduction
            vmem_limit_bytes=32 * 1024 * 1024,               # safe on v5e/v6e/v7x
        ),
    )(node_feats, h_node, batch_row, params["w_r"], b_r, w_g_row, b_g)

    # Combine the per-split partial slabs and unpack (free layout plumbing).
    slab = slab.reshape(num_splits, g_pad, c_pad).sum(axis=0)[:num_graphs]
    h_out = slab[:, :d]
    seg_h = slab[:, d:2 * d]
    c_out = seg_h - h_out                                   # sum((1-gate)*h)
    r_sum = slab[:, 2 * d:2 * d + 1]                        # sum(gate)
    node_count = slab[:, 2 * d + 1:2 * d + 2]               # sum(1) per graph
    env_sum = node_count - r_sum                            # sum(1-gate)
    return h_out, c_out, r_sum + 1e-8, env_sum + 1e-8


def _reference(node_feats, h_node, batch, params, num_graphs):
    x = jnp.maximum(node_feats @ params["w_r"] + params["b_r"], 0.0)
    gate = jax.nn.sigmoid(x @ params["w_g"] + params["b_g"]).reshape(-1, 1)
    seg = lambda v: jax.ops.segment_sum(v, batch, num_segments=num_graphs)
    return (seg(gate * h_node), seg((1.0 - gate) * h_node),
            seg(gate) + 1e-8, seg(1.0 - gate) + 1e-8)


if __name__ == "__main__":
    # Synthetic graph batch: 4 graphs with 260/240/210/190 nodes (N = 900).
    # With tile_n=256 and num_splits=2 this pads to 1024 nodes and exercises
    # node padding, multi-step accumulation per split, and the cross-split sum.
    F, DR, D, G = 16, 32, 32, 4
    sizes = [260, 240, 210, 190]
    N = sum(sizes)

    key = jax.random.PRNGKey(0)
    k1, k2, k3, k4, k5, k6 = jax.random.split(key, 6)

    node_feats = jax.random.normal(k1, (N, F), dtype=jnp.float32)
    h_node = jax.random.normal(k2, (N, D), dtype=jnp.float32)
    batch = jnp.concatenate([jnp.full((s,), g, dtype=jnp.int32)
                             for g, s in enumerate(sizes)])     # sorted graph ids

    params = {
        "w_r": jax.random.normal(k3, (F, DR), dtype=jnp.float32) * 0.1,
        "b_r": jax.random.normal(k4, (DR,), dtype=jnp.float32) * 0.1,
        "w_g": jax.random.normal(k5, (DR, 1), dtype=jnp.float32) * 0.1,
        "b_g": jax.random.normal(k6, (1,), dtype=jnp.float32) * 0.1,
    }

    h_out, c_out, r_num, env_num = jax.block_until_ready(
        separator_forward(node_feats, h_node, batch, params, G,
                          tile_n=256, num_splits=2))

    ref = _reference(node_feats, h_node, batch, params, G)
    for got, want in zip((h_out, c_out, r_num, env_num), ref):
        assert got.shape == want.shape, (got.shape, want.shape)
        assert jnp.allclose(got, want, atol=2e-4, rtol=2e-4), (
            float(jnp.max(jnp.abs(got - want))))

    print("KERNEL_OK")
</pallas_src>

<mosaic_0001>
module attributes {stable_mosaic.version = 11 : i64} {
  func.func @separator_kernel(%arg0: i32, %arg1: i32, %arg2: memref<256x16xf32, #tpu.memory_space<vmem>>, %arg3: memref<256x32xf32, #tpu.memory_space<vmem>>, %arg4: memref<1x256xi32, #tpu.memory_space<vmem>>, %arg5: memref<16x32xf32, #tpu.memory_space<vmem>>, %arg6: memref<1x32xf32, #tpu.memory_space<vmem>>, %arg7: memref<1x32xf32, #tpu.memory_space<vmem>>, %arg8: memref<1x1xf32, #tpu.memory_space<vmem>>, %arg9: memref<8x128xf32, #tpu.memory_space<vmem>>, %arg10: memref<256x128xf32, #tpu.memory_space<vmem>>) attributes {dimension_semantics = [#tpu.dimension_semantics<parallel>, #tpu.dimension_semantics<arbitrary>], iteration_bounds = array<i64: 2, 2>, scalar_prefetch = 0 : i64, scratch_operands = 1 : i64, tpu.core_type = #tpu.core_type<tc>, window_params = [{transform_indices = @transform_0, window_bounds = array<i64: 256, 16>}, {transform_indices = @transform_1, window_bounds = array<i64: 256, 32>}, {transform_indices = @transform_2, window_bounds = array<i64: 1, 256>}, {pipeline_mode = #tpu.pipeline_mode<synchronous>, transform_indices = @transform_3, window_bounds = array<i64: 16, 32>}, {pipeline_mode = #tpu.pipeline_mode<synchronous>, transform_indices = @transform_4, window_bounds = array<i64: 1, 32>}, {pipeline_mode = #tpu.pipeline_mode<synchronous>, transform_indices = @transform_5, window_bounds = array<i64: 1, 32>}, {pipeline_mode = #tpu.pipeline_mode<synchronous>, transform_indices = @transform_6, window_bounds = array<i64: 1, 1>}, {transform_indices = @transform_7, window_bounds = array<i64: 8, 128>}]} {
    %c0_i32 = arith.constant 0 : i32
    %0 = arith.cmpi eq, %arg1, %c0_i32 : i32
    %1 = arith.extui %0 : i1 to i32
    %c0_i32_0 = arith.constant 0 : i32
    %2 = arith.cmpi ne, %1, %c0_i32_0 : i32
    scf.if %2 {
      %cst_28 = arith.constant 0.000000e+00 : f32
      %41 = vector.broadcast %cst_28 : f32 to vector<8x128xf32>
      %c0_29 = arith.constant 0 : index
      %c0_30 = arith.constant 0 : index
      %42 = vector.load %arg9[%c0_29, %c0_30] : memref<8x128xf32, #tpu.memory_space<vmem>>, vector<8x128xf32>
      tpu.vector_store %arg9[%c0_29, %c0_30], %41 {strides = array<i32>} : memref<8x128xf32, #tpu.memory_space<vmem>>, vector<8x128xf32>,
      %cst_31 = arith.constant 0.000000e+00 : f32
      %43 = vector.broadcast %cst_31 : f32 to vector<256x128xf32>
      %c0_32 = arith.constant 0 : index
      %c0_33 = arith.constant 0 : index
      %44 = vector.load %arg10[%c0_32, %c0_33] : memref<256x128xf32, #tpu.memory_space<vmem>>, vector<256x128xf32>
      tpu.vector_store %arg10[%c0_32, %c0_33], %43 {strides = array<i32>} : memref<256x128xf32, #tpu.memory_space<vmem>>, vector<256x128xf32>,
      %cst_34 = arith.constant 1.000000e+00 : f32
      %45 = vector.broadcast %cst_34 : f32 to vector<256x1xf32>
      %c0_35 = arith.constant 0 : index
      %c65 = arith.constant 65 : index
      %46 = vector.load %arg10[%c0_35, %c65] : memref<256x128xf32, #tpu.memory_space<vmem>>, vector<256x1xf32>
      tpu.vector_store %arg10[%c0_35, %c65], %45 {strides = array<i32>} : memref<256x128xf32, #tpu.memory_space<vmem>>, vector<256x1xf32>,
    } else {
    }
    %c0 = arith.constant 0 : index
    %c0_1 = arith.constant 0 : index
    %3 = vector.load %arg2[%c0, %c0_1] : memref<256x16xf32, #tpu.memory_space<vmem>>, vector<256x16xf32>
    %c0_2 = arith.constant 0 : index
    %c0_3 = arith.constant 0 : index
    %4 = vector.load %arg5[%c0_2, %c0_3] : memref<16x32xf32, #tpu.memory_space<vmem>>, vector<16x32xf32>
    %cst = arith.constant dense<0.000000e+00> : vector<256x32xf32>
    %5 = tpu.matmul %3, %4, %cst {dimension_numbers = #tpu.dot_dimension_numbers<[1], [0], [0], [1], [0, 0, 1, 1], [], []>} : vector<256x16xf32>, vector<16x32xf32>, vector<256x32xf32> -> vector<256x32xf32>
    %c0_4 = arith.constant 0 : index
    %c0_5 = arith.constant 0 : index
    %6 = vector.load %arg6[%c0_4, %c0_5] : memref<1x32xf32, #tpu.memory_space<vmem>>, vector<1x32xf32>
    %7 = vector.broadcast %6 : vector<1x32xf32> to vector<256x32xf32>
    %8 = arith.addf %5, %7 : vector<256x32xf32>
    %cst_6 = arith.constant 0.000000e+00 : f32
    %9 = vector.broadcast %cst_6 : f32 to vector<256x32xf32>
    %10 = arith.maximumf %8, %9 : vector<256x32xf32>
    %c0_7 = arith.constant 0 : index
    %c0_8 = arith.constant 0 : index
    %11 = vector.load %arg7[%c0_7, %c0_8] : memref<1x32xf32, #tpu.memory_space<vmem>>, vector<1x32xf32>
    %12 = vector.broadcast %11 : vector<1x32xf32> to vector<256x32xf32>
    %13 = arith.mulf %10, %12 : vector<256x32xf32>
    %cst_9 = arith.constant dense<0.000000e+00> : vector<256xf32>
    %14 = vector.multi_reduction <add>, %13, %cst_9 [1] : vector<256x32xf32> to vector<256xf32>
    %15 = vector.shape_cast %14 : vector<256xf32> to vector<256x1xf32>
    %c0_10 = arith.constant 0 : index
    %c0_11 = arith.constant 0 : index
    %16 = vector.load %arg8[%c0_10, %c0_11] : memref<1x1xf32, #tpu.memory_space<vmem>>, vector<1x1xf32>
    %17 = vector.broadcast %16 : vector<1x1xf32> to vector<256x1xf32>
    %18 = arith.addf %15, %17 : vector<256x1xf32>
    %19 = arith.negf %18 : vector<256x1xf32>
    %20 = math.exp %19 : vector<256x1xf32>
    %cst_12 = arith.constant 1.000000e+00 : f32
    %21 = vector.broadcast %cst_12 : f32 to vector<256x1xf32>
    %22 = arith.addf %21, %20 : vector<256x1xf32>
    %23 = arith.divf %21, %22 : vector<256x1xf32>
    %c0_13 = arith.constant 0 : index
    %c0_14 = arith.constant 0 : index
    %24 = vector.load %arg3[%c0_13, %c0_14] : memref<256x32xf32, #tpu.memory_space<vmem>>, vector<256x32xf32>
    %25 = vector.broadcast %23 : vector<256x1xf32> to vector<256x32xf32>
    %26 = arith.mulf %25, %24 : vector<256x32xf32>
    %c0_15 = arith.constant 0 : index
    %c0_16 = arith.constant 0 : index
    %27 = vector.load %arg10[%c0_15, %c0_16] : memref<256x128xf32, #tpu.memory_space<vmem>>, vector<256x32xf32>
    tpu.vector_store %arg10[%c0_15, %c0_16], %26 {strides = array<i32>} : memref<256x128xf32, #tpu.memory_space<vmem>>, vector<256x32xf32>,
    %c0_17 = arith.constant 0 : index
    %c32 = arith.constant 32 : index
    %28 = vector.load %arg10[%c0_17, %c32] : memref<256x128xf32, #tpu.memory_space<vmem>>, vector<256x32xf32>
    tpu.vector_store %arg10[%c0_17, %c32], %24 {strides = array<i32>} : memref<256x128xf32, #tpu.memory_space<vmem>>, vector<256x32xf32>,
    %c0_18 = arith.constant 0 : index
    %c64 = arith.constant 64 : index
    %29 = vector.load %arg10[%c0_18, %c64] : memref<256x128xf32, #tpu.memory_space<vmem>>, vector<256x1xf32>
    tpu.vector_store %arg10[%c0_18, %c64], %23 {strides = array<i32>} : memref<256x128xf32, #tpu.memory_space<vmem>>, vector<256x1xf32>,
    %30 = tpu.iota {dimensions = array<i32: 0>} : vector<8x256xi32>
    %c0_19 = arith.constant 0 : index
    %c0_20 = arith.constant 0 : index
    %31 = vector.load %arg4[%c0_19, %c0_20] : memref<1x256xi32, #tpu.memory_space<vmem>>, vector<1x256xi32>
    %32 = vector.broadcast %31 : vector<1x256xi32> to vector<8x256xi32>
    %33 = arith.cmpi eq, %30, %32 : vector<8x256xi32>
    %34 = arith.extui %33 : vector<8x256xi1> to vector<8x256xi32>
    %35 = arith.sitofp %34 : vector<8x256xi32> to vector<8x256xf32>
    %c0_21 = arith.constant 0 : index
    %c0_22 = arith.constant 0 : index
    %36 = vector.load %arg9[%c0_21, %c0_22] : memref<8x128xf32, #tpu.memory_space<vmem>>, vector<8x128xf32>
    %c0_23 = arith.constant 0 : index
    %c0_24 = arith.constant 0 : index
    %37 = vector.load %arg10[%c0_23, %c0_24] : memref<256x128xf32, #tpu.memory_space<vmem>>, vector<256x128xf32>
    %cst_25 = arith.constant dense<0.000000e+00> : vector<8x128xf32>
    %38 = tpu.matmul %35, %37, %cst_25 {dimension_numbers = #tpu.dot_dimension_numbers<[1], [0], [0], [1], [0, 0, 1, 1], [], []>} : vector<8x256xf32>, vector<256x128xf32>, vector<8x128xf32> -> vector<8x128xf32>
    %39 = arith.addf %36, %38 : vector<8x128xf32>
    %c0_26 = arith.constant 0 : index
    %c0_27 = arith.constant 0 : index
    %40 = vector.load %arg9[%c0_26, %c0_27] : memref<8x128xf32, #tpu.memory_space<vmem>>, vector<8x128xf32>
    tpu.vector_store %arg9[%c0_26, %c0_27], %39 {strides = array<i32>} : memref<8x128xf32, #tpu.memory_space<vmem>>, vector<8x128xf32>,
    return
  }
  func.func @transform_0(%arg0: i32, %arg1: i32) -> (i32, i32) {
    %c2_i32 = arith.constant 2 : i32
    %0 = arith.muli %arg0, %c2_i32 : i32
    %1 = arith.addi %0, %arg1 : i32
    %c0_i32 = arith.constant 0 : i32
    %c0_i32_0 = arith.constant 0 : i32
    return %1, %c0_i32 : i32, i32
  }
  func.func @transform_1(%arg0: i32, %arg1: i32) -> (i32, i32) {
    %c2_i32 = arith.constant 2 : i32
    %0 = arith.muli %arg0, %c2_i32 : i32
    %1 = arith.addi %0, %arg1 : i32
    %c0_i32 = arith.constant 0 : i32
    %c0_i32_0 = arith.constant 0 : i32
    return %1, %c0_i32 : i32, i32
  }
  func.func @transform_2(%arg0: i32, %arg1: i32) -> (i32, i32) {
    %c2_i32 = arith.constant 2 : i32
    %0 = arith.muli %arg0, %c2_i32 : i32
    %1 = arith.addi %0, %arg1 : i32
    %c0_i32 = arith.constant 0 : i32
    %c0_i32_0 = arith.constant 0 : i32
    return %c0_i32, %1 : i32, i32
  }
  func.func @transform_3(%arg0: i32, %arg1: i32) -> (i32, i32) {
    %c0_i32 = arith.constant 0 : i32
    %c0_i32_0 = arith.constant 0 : i32
    %c0_i32_1 = arith.constant 0 : i32
    return %c0_i32, %c0_i32_0 : i32, i32
  }
  func.func @transform_4(%arg0: i32, %arg1: i32) -> (i32, i32) {
    %c0_i32 = arith.constant 0 : i32
    %c0_i32_0 = arith.constant 0 : i32
    %c0_i32_1 = arith.constant 0 : i32
    return %c0_i32, %c0_i32_0 : i32, i32
  }
  func.func @transform_5(%arg0: i32, %arg1: i32) -> (i32, i32) {
    %c0_i32 = arith.constant 0 : i32
    %c0_i32_0 = arith.constant 0 : i32
    %c0_i32_1 = arith.constant 0 : i32
    return %c0_i32, %c0_i32_0 : i32, i32
  }
  func.func @transform_6(%arg0: i32, %arg1: i32) -> (i32, i32) {
    %c0_i32 = arith.constant 0 : i32
    %c0_i32_0 = arith.constant 0 : i32
    %c0_i32_1 = arith.constant 0 : i32
    return %c0_i32, %c0_i32_0 : i32, i32
  }
  func.func @transform_7(%arg0: i32, %arg1: i32) -> (i32, i32) {
    %c0_i32 = arith.constant 0 : i32
    %c0_i32_0 = arith.constant 0 : i32
    return %arg0, %c0_i32 : i32, i32
  }
}

</mosaic_0001>

<llo_original>
// kernel: tpu_custom_call.1
$region0: #{tpu_custom_call.1}
  #allocation0 [shape = 'u32[]', space=smem, size = 0x4, offset = 0x4, fixed_abs, tag = 'smem constant byte address 0x4 - core index']
  #allocation1 [shape = 'u32[72,128]{1,0:T(1,128)}', space=vmem, size = 0x9000, scoped, tag = 'internal scratch']
  #allocation2 [shape = 'f32[256,128]{1,0:T(8,128)}', space=vmem, size = 0x20000, scoped, tag = 'scratch operand']
  #allocation3 [shape = 'f32[1,1]{1,0:T(1,128)S(1)}', space=vmem, size = 0x200, scoped, tag = 'scoped memory for tpu_custom_call.1']
  %s0 = inlined_call_operand.vmem [shape: f32[1024,16], index: 0, kind: input, shape index: {}]
  %s1 = inlined_call_operand.vmem [shape: f32[1024,32], index: 1, kind: input, shape index: {}]
  %s2 = inlined_call_operand.vmem [shape: s32[1,1024], index: 2, kind: input, shape index: {}]
  %s3 = inlined_call_operand.vmem [shape: f32[16,32], index: 3, kind: input, shape index: {}]
  %s4 = inlined_call_operand.vmem [shape: f32[1,32], index: 4, kind: input, shape index: {}]
  %s5 = inlined_call_operand.vmem [shape: f32[1,32], index: 5, kind: input, shape index: {}]
  %s6 = inlined_call_operand.<no memory space> [shape: f32[1,1], index: 6, kind: input, shape index: {}]
  %s7 = inlined_call_operand.hbm [shape: f32[16,128], index: 7, kind: output, shape index: {}]
  %s8 = sld [smem:[#allocation0]]
  $region65: #{tpu_custom_call.1} parent=0
    _
  %s10 = ssub.s32 1, %s8
  %s11 = scalar_select 0, %s10, %s8
  %v12 = vstv %s6
  %13 = vst [vmem:[#allocation3] sm:$0x1] %v12
  $region1: #{tpu_custom_call.1} parent=0
    #allocation4 [shape = 'u8[8192]{0}', space=vmem, size = 0x2000, scoped, tag = 'output window, operand 0']
    #allocation5 [shape = 's32[2]{0}', space=sflag, size = 0x8, scoped, tag = 'scoped memory for tpu_custom_call.1']
    %14 = vsyncpa [#allocation5], 0
    %s15 = scalar_lea.sflag [#allocation5], 1
    %16 = vsyncpa %s15, 0
    loop: start=0, step=1, limit=6
    $region2: #{tpu_custom_call.1} parent=1 // loop_pre_header
      _
    $region3: #{tpu_custom_call.1} parent=1 // loop_header
      %s18 = sphi 0, %s22
      %p19 = scmp.ge.s32.totalorder %s18, 6
      %s25 = sphi 0, %s37
      %s26 = sphi 0, %s33
      %s27 = sphi 0, %s25
      %s28 = sphi 0, %s26
      %s29 = sphi 0, %s27
      %s30 = sphi 0, %s28
      %s44 = sphi 0, %s46
      %s47 = sphi 0, %s44
      %s48 = sphi 0, %s47
      %s64 = sphi 0, %s48
      %s74 = sphi 0, %s76
      %s77 = sphi 0, %s74
      %s78 = sphi 0, %s77
      %s94 = sphi 0, %s78
      %s104 = sphi 0, %s106
      %s107 = sphi 0, %s104
      %s108 = sphi 0, %s107
      %s124 = sphi 0, %s108
      %s128 = sphi 0, %s128
      %s130 = sphi 0, %s128
      %s131 = sphi 0, %s130
      %s145 = sphi 0, %s131
      %s149 = sphi 0, %s149
      %s151 = sphi 0, %s149
      %s152 = sphi 0, %s151
      %s166 = sphi 0, %s152
      %s170 = sphi 0, %s170
      %s172 = sphi 0, %s170
      %s173 = sphi 0, %s172
      %s187 = sphi 0, %s173
      %s191 = sphi 0, %s191
      %s193 = sphi 0, %s191
      %s194 = sphi 0, %s193
      %s208 = sphi 0, %s194
      %s214 = sphi 0, %s216
      %s217 = sphi 0, %s214
      %s218 = sphi 0, %s217
      %s234 = sphi 0, %s218
    $region4: #{tpu_custom_call.1} parent=1 // loop_header_branch
      %21 = sbr.rel (%p19) target = $region8
    $region5: #{tpu_custom_call.1} parent=1 // loop_body
      %s23 = ssub.s32 %s18, 1
      %s24 = ssub.s32 %s18, 2
      %s31 = sadd.s32 1, %s26
      %p32 = scmp.ge.s32.totalorder %s31, 2
      %s33 = scalar_select %p32, 0, %s31
      %s34 = sadd.s32 1, %s25
      %s35 = scalar_select %p32, %s34, %s25
      %p36 = scmp.ge.s32.totalorder %s35, 2
      %s37 = scalar_select %p36, 0, %s35
      %s38 = smul.u32 %s25, 2
      %s39 = sadd.s32 %s38, %s26
      %s40 = smul.u32 %s37, 2
      %s41 = sadd.s32 %s40, %s33
      %s42 = ssub.s32 %s39, %s41
      %p43 = scmp.eq.s32.totalorder %s42, 0
      %s45 = sadd.s32 %s44, 1
      %s46 = scalar_select %p43, %s44, %s45
      %p49 = pneg %p43
      %p50 = scmp.eq.s32.totalorder %s18, 3
      %p51 = por %p49, %p50
      %p52 = scmp.ne.s32.totalorder %s44, %s47
      %p53 = scmp.eq.s32.totalorder %s18, 0
      %p54 = por %p52, %p53
      %p55 = scmp.ne.s32.totalorder %s44, %s47
      %p56 = scmp.eq.s32.totalorder %s23, 3
      %p57 = por %p55, %p56
      %p58 = scmp.ne.s32.totalorder %s47, %s48
      %p59 = scmp.eq.s32.totalorder %s23, 0
      %p60 = por %p58, %p59
      %p61 = scmp.ne.s32.totalorder %s47, %s48
      %p62 = scmp.eq.s32.totalorder %s24, 3
      %p63 = por %p61, %p62
      %p65 = scmp.ne.s32.totalorder %s48, %s64
      %p66 = scmp.eq.s32.totalorder %s24, 0
      %p67 = por %p65, %p66
      %s68 = smul.u32 %s25, 2
      %s69 = sadd.s32 %s68, %s26
      %s70 = smul.u32 %s37, 2
      %s71 = sadd.s32 %s70, %s33
      %s72 = ssub.s32 %s69, %s71
      %p73 = scmp.eq.s32.totalorder %s72, 0
      %s75 = sadd.s32 %s74, 1
      %s76 = scalar_select %p73, %s74, %s75
      %p79 = pneg %p73
      %p80 = scmp.eq.s32.totalorder %s18, 3
      %p81 = por %p79, %p80
      %p82 = scmp.ne.s32.totalorder %s74, %s77
      %p83 = scmp.eq.s32.totalorder %s18, 0
      %p84 = por %p82, %p83
      %p85 = scmp.ne.s32.totalorder %s74, %s77
      %p86 = scmp.eq.s32.totalorder %s23, 3
      %p87 = por %p85, %p86
      %p88 = scmp.ne.s32.totalorder %s77, %s78
      %p89 = scmp.eq.s32.totalorder %s23, 0
      %p90 = por %p88, %p89
      %p91 = scmp.ne.s32.totalorder %s77, %s78
      %p92 = scmp.eq.s32.totalorder %s24, 3
      %p93 = por %p91, %p92
      %p95 = scmp.ne.s32.totalorder %s78, %s94
      %p96 = scmp.eq.s32.totalorder %s24, 0
      %p97 = por %p95, %p96
      %s98 = smul.u32 %s25, 2
      %s99 = sadd.s32 %s98, %s26
      %s100 = smul.u32 %s37, 2
      %s101 = sadd.s32 %s100, %s33
      %s102 = ssub.s32 %s99, %s101
      %p103 = scmp.eq.s32.totalorder %s102, 0
      %s105 = sadd.s32 %s104, 1
      %s106 = scalar_select %p103, %s104, %s105
      %p109 = pneg %p103
      %p110 = scmp.eq.s32.totalorder %s18, 3
      %p111 = por %p109, %p110
      %p112 = scmp.ne.s32.totalorder %s104, %s107
      %p113 = scmp.eq.s32.totalorder %s18, 0
      %p114 = por %p112, %p113
      %p115 = scmp.ne.s32.totalorder %s104, %s107
      %p116 = scmp.eq.s32.totalorder %s23, 3
      %p117 = por %p115, %p116
      %p118 = scmp.ne.s32.totalorder %s107, %s108
      %p119 = scmp.eq.s32.totalorder %s23, 0
      %p120 = por %p118, %p119
      %p121 = scmp.ne.s32.totalorder %s107, %s108
      %p122 = scmp.eq.s32.totalorder %s24, 3
      %p123 = por %p121, %p122
      %p125 = scmp.ne.s32.totalorder %s108, %s124
      %p126 = scmp.eq.s32.totalorder %s24, 0
      %p127 = por %p125, %p126
      %s129 = sadd.s32 %s128, 1
      %p132 = scmp.eq.s32.totalorder %s18, 3
      %p133 = scmp.ne.s32.totalorder %s128, %s130
      %p134 = scmp.eq.s32.totalorder %s18, 0
      %p135 = por %p133, %p134
      %p136 = scmp.ne.s32.totalorder %s128, %s130
      %p137 = scmp.eq.s32.totalorder %s23, 3
      %p138 = por %p136, %p137
      %p139 = scmp.ne.s32.totalorder %s130, %s131
      %p140 = scmp.eq.s32.totalorder %s23, 0
      %p141 = por %p139, %p140
      %p142 = scmp.ne.s32.totalorder %s130, %s131
      %p143 = scmp.eq.s32.totalorder %s24, 3
      %p144 = por %p142, %p143
      %p146 = scmp.ne.s32.totalorder %s131, %s145
      %p147 = scmp.eq.s32.totalorder %s24, 0
      %p148 = por %p146, %p147
      %s150 = sadd.s32 %s149, 1
      %p153 = scmp.eq.s32.totalorder %s18, 3
      %p154 = scmp.ne.s32.totalorder %s149, %s151
      %p155 = scmp.eq.s32.totalorder %s18, 0
      %p156 = por %p154, %p155
      %p157 = scmp.ne.s32.totalorder %s149, %s151
      %p158 = scmp.eq.s32.totalorder %s23, 3
      %p159 = por %p157, %p158
      %p160 = scmp.ne.s32.totalorder %s151, %s152
      %p161 = scmp.eq.s32.totalorder %s23, 0
      %p162 = por %p160, %p161
      %p163 = scmp.ne.s32.totalorder %s151, %s152
      %p164 = scmp.eq.s32.totalorder %s24, 3
      %p165 = por %p163, %p164
      %p167 = scmp.ne.s32.totalorder %s152, %s166
      %p168 = scmp.eq.s32.totalorder %s24, 0
      %p169 = por %p167, %p168
      %s171 = sadd.s32 %s170, 1
      %p174 = scmp.eq.s32.totalorder %s18, 3
      %p175 = scmp.ne.s32.totalorder %s170, %s172
      %p176 = scmp.eq.s32.totalorder %s18, 0
      %p177 = por %p175, %p176
      %p178 = scmp.ne.s32.totalorder %s170, %s172
      %p179 = scmp.eq.s32.totalorder %s23, 3
      %p180 = por %p178, %p179
      %p181 = scmp.ne.s32.totalorder %s172, %s173
      %p182 = scmp.eq.s32.totalorder %s23, 0
      %p183 = por %p181, %p182
      %p184 = scmp.ne.s32.totalorder %s172, %s173
      %p185 = scmp.eq.s32.totalorder %s24, 3
      %p186 = por %p184, %p185
      %p188 = scmp.ne.s32.totalorder %s173, %s187
      %p189 = scmp.eq.s32.totalorder %s24, 0
      %p190 = por %p188, %p189
      %s192 = sadd.s32 %s191, 1
      %p195 = scmp.eq.s32.totalorder %s18, 3
      %p196 = scmp.ne.s32.totalorder %s191, %s193
      %p197 = scmp.eq.s32.totalorder %s18, 0
      %p198 = por %p196, %p197
      %p199 = scmp.ne.s32.totalorder %s191, %s193
      %p200 = scmp.eq.s32.totalorder %s23, 3
      %p201 = por %p199, %p200
      %p202 = scmp.ne.s32.totalorder %s193, %s194
      %p203 = scmp.eq.s32.totalorder %s23, 0
      %p204 = por %p202, %p203
      %p205 = scmp.ne.s32.totalorder %s193, %s194
      %p206 = scmp.eq.s32.totalorder %s24, 3
      %p207 = por %p205, %p206
      %p209 = scmp.ne.s32.totalorder %s194, %s208
      %p210 = scmp.eq.s32.totalorder %s24, 0
      %p211 = por %p209, %p210
      %s212 = ssub.s32 %s25, %s37
      %p213 = scmp.eq.s32.totalorder %s212, 0
      %s215 = sadd.s32 %s214, 1
      %s216 = scalar_select %p213, %s214, %s215
      %p219 = pneg %p213
      %p220 = scmp.eq.s32.totalorder %s18, 3
      %p221 = por %p219, %p220
      %p222 = scmp.ne.s32.totalorder %s214, %s217
      %p223 = scmp.eq.s32.totalorder %s18, 0
      %p224 = por %p222, %p223
      %p225 = scmp.ne.s32.totalorder %s214, %s217
      %p226 = scmp.eq.s32.totalorder %s23, 3
      %p227 = por %p225, %p226
      %p228 = scmp.ne.s32.totalorder %s217, %s218
      %p229 = scmp.eq.s32.totalorder %s23, 0
      %p230 = por %p228, %p229
      %p231 = scmp.ne.s32.totalorder %s217, %s218
      %p232 = scmp.eq.s32.totalorder %s24, 3
      %p233 = por %p231, %p232
      %p235 = scmp.ne.s32.totalorder %s218, %s234
      %p236 = scmp.eq.s32.totalorder %s24, 0
      %p237 = por %p235, %p236
      %p238 = scmp.le.s32.totalorder 1, %s18
      %p239 = scmp.lt.s32.totalorder %s18, 5
      %p240 = pnand %p238, %p239
      %p241 = pneg %p240
      // Predicated region
      $region9: #{tpu_custom_call.1} parent=5 // pred_check
        _
      $region10: #{tpu_custom_call.1} parent=5 // pred_check_branch
        %243 = sbr.rel (%p240) target = $region12
      $region11: #{tpu_custom_call.1} parent=5 // pred_region
        %s244 = ssub.s32 %s18, 1
        // Predicated region
        $region13: #{tpu_custom_call.1} parent=11 // pred_check
          %p245 = pneg %p141
        $region14: #{tpu_custom_call.1} parent=11 // pred_check_branch
          %247 = sbr.rel (%p245) target = $region16
        $region15: #{tpu_custom_call.1} parent=11 // pred_region
          _
        $region16: #{tpu_custom_call.1} parent=11 // pred_fallthru
          _
        // Predicated region
        $region17: #{tpu_custom_call.1} parent=11 // pred_check
          %p248 = pneg %p162
        $region18: #{tpu_custom_call.1} parent=11 // pred_check_branch
          %250 = sbr.rel (%p248) target = $region20
        $region19: #{tpu_custom_call.1} parent=11 // pred_region
          _
        $region20: #{tpu_custom_call.1} parent=11 // pred_fallthru
          _
        // Predicated region
        $region21: #{tpu_custom_call.1} parent=11 // pred_check
          %p251 = pneg %p183
        $region22: #{tpu_custom_call.1} parent=11 // pred_check_branch
          %253 = sbr.rel (%p251) target = $region24
        $region23: #{tpu_custom_call.1} parent=11 // pred_region
          _
        $region24: #{tpu_custom_call.1} parent=11 // pred_fallthru
          _
        // Predicated region
        $region25: #{tpu_custom_call.1} parent=11 // pred_check
          %p254 = pneg %p204
        $region26: #{tpu_custom_call.1} parent=11 // pred_check_branch
          %256 = sbr.rel (%p254) target = $region28
        $region27: #{tpu_custom_call.1} parent=11 // pred_region
          _
        $region28: #{tpu_custom_call.1} parent=11 // pred_fallthru
          _
      $region12: #{tpu_custom_call.1} parent=5 // pred_fallthru
        _
      %p257 = scmp.lt.s32.totalorder %s18, 4
      // Predicated region
      $region29: #{tpu_custom_call.1} parent=5 // pred_check
        %p258 = pneg %p257
      $region30: #{tpu_custom_call.1} parent=5 // pred_check_branch
        %260 = sbr.rel (%p258) target = $region32
      $region31: #{tpu_custom_call.1} parent=5 // pred_region
        // Predicated region
        $region33: #{tpu_custom_call.1} parent=31 // pred_check
          %p261 = pneg %p54
        $region34: #{tpu_custom_call.1} parent=31 // pred_check_branch
          %263 = sbr.rel (%p261) target = $region36
        $region35: #{tpu_custom_call.1} parent=31 // pred_region
          %s264 = smul.u32 %s25, 2
          %s265 = sadd.s32 %s264, %s26
          %s266 = smul.u32 32, %s265
          %p267 = scmp.lt.s32.totalorder %s266, 127
          %s268 = scalar_select %p267, %s266, 127
          %s269 = smul.addr %s268, 8
          %s270 = scalar_lea.vmem %s0, %s269
          %s271 = smul.u32 %s25, 2
          %s272 = sadd.s32 %s271, %s26
          %s273 = smul.u32 32, %s272
        $region36: #{tpu_custom_call.1} parent=31 // pred_fallthru
          _
        // Predicated region
        $region37: #{tpu_custom_call.1} parent=31 // pred_check
          %p274 = pneg %p84
        $region38: #{tpu_custom_call.1} parent=31 // pred_check_branch
          %276 = sbr.rel (%p274) target = $region40
        $region39: #{tpu_custom_call.1} parent=31 // pred_region
          %s277 = smul.u32 %s25, 2
          %s278 = sadd.s32 %s277, %s26
          %s279 = smul.u32 32, %s278
          %p280 = scmp.lt.s32.totalorder %s279, 127
          %s281 = scalar_select %p280, %s279, 127
          %s282 = smul.addr %s281, 8
          %s283 = scalar_lea.vmem %s1, %s282
          %s284 = smul.u32 %s25, 2
          %s285 = sadd.s32 %s284, %s26
          %s286 = smul.u32 32, %s285
        $region40: #{tpu_custom_call.1} parent=31 // pred_fallthru
          _
        // Predicated region
        $region41: #{tpu_custom_call.1} parent=31 // pred_check
          %p287 = pneg %p114
        $region42: #{tpu_custom_call.1} parent=31 // pred_check_branch
          %289 = sbr.rel (%p287) target = $region44
        $region43: #{tpu_custom_call.1} parent=31 // pred_region
          %s290 = smul.u32 %s25, 2
          %s291 = sadd.s32 %s290, %s26
          %s292 = smul.u32 2, %s291
          %p293 = scmp.lt.s32.totalorder %s292, 7
          %s294 = scalar_select %p293, %s292, 7
          %s295 = scalar_lea.vmem %s2, %s294
          %s296 = smul.u32 %s25, 2
          %s297 = sadd.s32 %s296, %s26
          %s298 = smul.u32 2, %s297
        $region44: #{tpu_custom_call.1} parent=31 // pred_fallthru
          _
      $region32: #{tpu_custom_call.1} parent=5 // pred_fallthru
        _
      %p299 = scmp.le.s32.totalorder 1, %s18
      %p300 = scmp.lt.s32.totalorder %s18, 5
      %p301 = pnand %p299, %p300
      %p302 = pneg %p301
      // Predicated region
      $region45: #{tpu_custom_call.1} parent=5 // pred_check
        _
      $region46: #{tpu_custom_call.1} parent=5 // pred_check_branch
        %304 = sbr.rel (%p301) target = $region48
      $region47: #{tpu_custom_call.1} parent=5 // pred_region
        %s305 = ssub.s32 %s18, 1
        %s306 = smul.u32 %s27, 2
        %s307 = sadd.s32 %s306, %s28
        %s308 = smul.u32 32, %s307
        %p309 = scmp.lt.s32.totalorder %s308, 127
        %s310 = scalar_select %p309, %s308, 127
        %s311 = smul.addr %s310, 8
        %s312 = scalar_lea.vmem %s0, %s311
        %p313 = pneg %p60
        %p314 = pneg %p57
        %s315 = smul.u32 %s27, 2
        %s316 = sadd.s32 %s315, %s28
        %s317 = smul.u32 32, %s316
        %p318 = scmp.lt.s32.totalorder %s317, 127
        %s319 = scalar_select %p318, %s317, 127
        %s320 = smul.addr %s319, 8
        %s321 = scalar_lea.vmem %s1, %s320
        %p322 = pneg %p90
        %p323 = pneg %p87
        %s324 = smul.u32 %s27, 2
        %s325 = sadd.s32 %s324, %s28
        %s326 = smul.u32 2, %s325
        %p327 = scmp.lt.s32.totalorder %s326, 7
        %s328 = scalar_select %p327, %s326, 7
        %s329 = scalar_lea.vmem %s2, %s328
        %p330 = pneg %p120
        %p331 = pneg %p117
        %p332 = pneg %p141
        %p333 = pneg %p138
        %p334 = pneg %p162
        %p335 = pneg %p159
        %p336 = pneg %p183
        %p337 = pneg %p180
        %p338 = pneg %p204
        %p339 = pneg %p201
        %p340 = pneg %p230
        %p341 = pneg %p227
        %s342 = sand.u32 %s217, 1
        %s343 = scalar_lea.sflag [#allocation5], %s342
        %s344 = sand.u32 %s217, 1
        %s345 = smul.addr %s344, 8
        %s346 = scalar_lea.vmem [#allocation4], %s345
        %s347 = smul.u32 %s27, 2
        %s348 = sadd.s32 %s347, %s28
        %s349 = smul.u32 32, %s348
        %p350 = scmp.lt.s32.totalorder %s349, 127
        %s351 = scalar_select %p350, %s349, 127
        %s352 = smul.addr %s351, 8
        %s353 = scalar_lea.vmem %s0, %s352
        %s354 = smul.u32 %s27, 2
        %s355 = sadd.s32 %s354, %s28
        %s356 = smul.u32 32, %s355
        %s357 = smul.u32 %s27, 2
        %s358 = sadd.s32 %s357, %s28
        %s359 = smul.u32 32, %s358
        %p360 = scmp.lt.s32.totalorder %s359, 127
        %s361 = scalar_select %p360, %s359, 127
        %s362 = smul.addr %s361, 8
        %s363 = scalar_lea.vmem %s1, %s362
        %s364 = smul.u32 %s27, 2
        %s365 = sadd.s32 %s364, %s28
        %s366 = smul.u32 32, %s365
        %s367 = smul.u32 %s27, 2
        %s368 = sadd.s32 %s367, %s28
        %s369 = smul.u32 2, %s368
        %p370 = scmp.lt.s32.totalorder %s369, 7
        %s371 = scalar_select %p370, %s369, 7
        %s372 = scalar_lea.vmem %s2, %s371
        %s373 = smul.u32 %s27, 2
        %s374 = sadd.s32 %s373, %s28
        %s375 = smul.u32 2, %s374
        %p376 = scmp.eq.s32.totalorder %s28, 0
        // Predicated region
        $region49: #{tpu_custom_call.1} parent=47 // pred_check
          %p377 = pneg %p376
        $region50: #{tpu_custom_call.1} parent=47 // pred_check_branch
          %379 = sbr.rel (%p377) target = $region52
        $region51: #{tpu_custom_call.1} parent=47 // pred_region
          %380 = vst [vmem:[%s346] sm:$0xff] 0.0
          %381 = vst [vmem:[#allocation2] sm:$0xff] 0.0
          %382 = vst [vmem:[#allocation2 + $0x8] sm:$0xff] 0.0
          %383 = vst [vmem:[#allocation2 + $0x10] sm:$0xff] 0.0
          %384 = vst [vmem:[#allocation2 + $0x18] sm:$0xff] 0.0
          %385 = vst [vmem:[#allocation2 + $0x20] sm:$0xff] 0.0
          %386 = vst [vmem:[#allocation2 + $0x28] sm:$0xff] 0.0
          %387 = vst [vmem:[#allocation2 + $0x30] sm:$0xff] 0.0
          %388 = vst [vmem:[#allocation2 + $0x38] sm:$0xff] 0.0
          %389 = vst [vmem:[#allocation2 + $0x40] sm:$0xff] 0.0
          %390 = vst [vmem:[#allocation2 + $0x48] sm:$0xff] 0.0
          %391 = vst [vmem:[#allocation2 + $0x50] sm:$0xff] 0.0
          %392 = vst [vmem:[#allocation2 + $0x58] sm:$0xff] 0.0
          %393 = vst [vmem:[#allocation2 + $0x60] sm:$0xff] 0.0
          %394 = vst [vmem:[#allocation2 + $0x68] sm:$0xff] 0.0
          %395 = vst [vmem:[#allocation2 + $0x70] sm:$0xff] 0.0
          %396 = vst [vmem:[#allocation2 + $0x78] sm:$0xff] 0.0
          %397 = vst [vmem:[#allocation2 + $0x80] sm:$0xff] 0.0
          %398 = vst [vmem:[#allocation2 + $0x88] sm:$0xff] 0.0
          %399 = vst [vmem:[#allocation2 + $0x90] sm:$0xff] 0.0
          %400 = vst [vmem:[#allocation2 + $0x98] sm:$0xff] 0.0
          %401 = vst [vmem:[#allocation2 + $0xa0] sm:$0xff] 0.0
          %402 = vst [vmem:[#allocation2 + $0xa8] sm:$0xff] 0.0
          %403 = vst [vmem:[#allocation2 + $0xb0] sm:$0xff] 0.0
          %404 = vst [vmem:[#allocation2 + $0xb8] sm:$0xff] 0.0
          %405 = vst [vmem:[#allocation2 + $0xc0] sm:$0xff] 0.0
          %406 = vst [vmem:[#allocation2 + $0xc8] sm:$0xff] 0.0
          %407 = vst [vmem:[#allocation2 + $0xd0] sm:$0xff] 0.0
          %408 = vst [vmem:[#allocation2 + $0xd8] sm:$0xff] 0.0
          %409 = vst [vmem:[#allocation2 + $0xe0] sm:$0xff] 0.0
          %410 = vst [vmem:[#allocation2 + $0xe8] sm:$0xff] 0.0
          %411 = vst [vmem:[#allocation2 + $0xf0] sm:$0xff] 0.0
          %412 = vst [vmem:[#allocation2 + $0xf8] sm:$0xff] 0.0
          %vm413 = vcmask 540168
          %414 = vst.msk [vmem:[#allocation2] sm:$0xff] %vm413, 1.0
          %415 = vst.msk [vmem:[#allocation2 + $0x8] sm:$0xff] %vm413, 1.0
          %416 = vst.msk [vmem:[#allocation2 + $0x10] sm:$0xff] %vm413, 1.0
          %417 = vst.msk [vmem:[#allocation2 + $0x18] sm:$0xff] %vm413, 1.0
          %418 = vst.msk [vmem:[#allocation2 + $0x20] sm:$0xff] %vm413, 1.0
          %419 = vst.msk [vmem:[#allocation2 + $0x28] sm:$0xff] %vm413, 1.0
          %420 = vst.msk [vmem:[#allocation2 + $0x30] sm:$0xff] %vm413, 1.0
          %421 = vst.msk [vmem:[#allocation2 + $0x38] sm:$0xff] %vm413, 1.0
          %422 = vst.msk [vmem:[#allocation2 + $0x40] sm:$0xff] %vm413, 1.0
          %423 = vst.msk [vmem:[#allocation2 + $0x48] sm:$0xff] %vm413, 1.0
          %424 = vst.msk [vmem:[#allocation2 + $0x50] sm:$0xff] %vm413, 1.0
          %425 = vst.msk [vmem:[#allocation2 + $0x58] sm:$0xff] %vm413, 1.0
          %426 = vst.msk [vmem:[#allocation2 + $0x60] sm:$0xff] %vm413, 1.0
          %427 = vst.msk [vmem:[#allocation2 + $0x68] sm:$0xff] %vm413, 1.0
          %428 = vst.msk [vmem:[#allocation2 + $0x70] sm:$0xff] %vm413, 1.0
          %429 = vst.msk [vmem:[#allocation2 + $0x78] sm:$0xff] %vm413, 1.0
          %430 = vst.msk [vmem:[#allocation2 + $0x80] sm:$0xff] %vm413, 1.0
          %431 = vst.msk [vmem:[#allocation2 + $0x88] sm:$0xff] %vm413, 1.0
          %432 = vst.msk [vmem:[#allocation2 + $0x90] sm:$0xff] %vm413, 1.0
          %433 = vst.msk [vmem:[#allocation2 + $0x98] sm:$0xff] %vm413, 1.0
          %434 = vst.msk [vmem:[#allocation2 + $0xa0] sm:$0xff] %vm413, 1.0
          %435 = vst.msk [vmem:[#allocation2 + $0xa8] sm:$0xff] %vm413, 1.0
          %436 = vst.msk [vmem:[#allocation2 + $0xb0] sm:$0xff] %vm413, 1.0
          %437 = vst.msk [vmem:[#allocation2 + $0xb8] sm:$0xff] %vm413, 1.0
          %438 = vst.msk [vmem:[#allocation2 + $0xc0] sm:$0xff] %vm413, 1.0
          %439 = vst.msk [vmem:[#allocation2 + $0xc8] sm:$0xff] %vm413, 1.0
          %440 = vst.msk [vmem:[#allocation2 + $0xd0] sm:$0xff] %vm413, 1.0
          %441 = vst.msk [vmem:[#allocation2 + $0xd8] sm:$0xff] %vm413, 1.0
          %442 = vst.msk [vmem:[#allocation2 + $0xe0] sm:$0xff] %vm413, 1.0
          %443 = vst.msk [vmem:[#allocation2 + $0xe8] sm:$0xff] %vm413, 1.0
          %444 = vst.msk [vmem:[#allocation2 + $0xf0] sm:$0xff] %vm413, 1.0
          %445 = vst.msk [vmem:[#allocation2 + $0xf8] sm:$0xff] %vm413, 1.0
        $region52: #{tpu_custom_call.1} parent=47 // pred_fallthru
          _
        %v446 = vld [vmem:[%s353] sm:$0xff]
        %v447 = vld [vmem:[%s353 + $0x8] sm:$0xff]
        %v448 = vld [vmem:[%s353 + $0x10] sm:$0xff]
        %v449 = vld [vmem:[%s353 + $0x18] sm:$0xff]
        %v450 = vld [vmem:[%s353 + $0x20] sm:$0xff]
        %v451 = vld [vmem:[%s353 + $0x28] sm:$0xff]
        %v452 = vld [vmem:[%s353 + $0x30] sm:$0xff]
        %v453 = vld [vmem:[%s353 + $0x38] sm:$0xff]
        %v454 = vld [vmem:[%s353 + $0x40] sm:$0xff]
        %v455 = vld [vmem:[%s353 + $0x48] sm:$0xff]
        %v456 = vld [vmem:[%s353 + $0x50] sm:$0xff]
        %v457 = vld [vmem:[%s353 + $0x58] sm:$0xff]
        %v458 = vld [vmem:[%s353 + $0x60] sm:$0xff]
        %v459 = vld [vmem:[%s353 + $0x68] sm:$0xff]
        %v460 = vld [vmem:[%s353 + $0x70] sm:$0xff]
        %v461 = vld [vmem:[%s353 + $0x78] sm:$0xff]
        %v462 = vld [vmem:[%s353 + $0x80] sm:$0xff]
        %v463 = vld [vmem:[%s353 + $0x88] sm:$0xff]
        %v464 = vld [vmem:[%s353 + $0x90] sm:$0xff]
        %v465 = vld [vmem:[%s353 + $0x98] sm:$0xff]
        %v466 = vld [vmem:[%s353 + $0xa0] sm:$0xff]
        %v467 = vld [vmem:[%s353 + $0xa8] sm:$0xff]
        %v468 = vld [vmem:[%s353 + $0xb0] sm:$0xff]
        %v469 = vld [vmem:[%s353 + $0xb8] sm:$0xff]
        %v470 = vld [vmem:[%s353 + $0xc0] sm:$0xff]
        %v471 = vld [vmem:[%s353 + $0xc8] sm:$0xff]
        %v472 = vld [vmem:[%s353 + $0xd0] sm:$0xff]
        %v473 = vld [vmem:[%s353 + $0xd8] sm:$0xff]
        %v474 = vld [vmem:[%s353 + $0xe0] sm:$0xff]
        %v475 = vld [vmem:[%s353 + $0xe8] sm:$0xff]
        %v476 = vld [vmem:[%s353 + $0xf0] sm:$0xff]
        %v477 = vld [vmem:[%s353 + $0xf8] sm:$0xff]
        %v478 = vld [vmem:[%s3] sm:$0xff]
        %v479 = vld [vmem:[%s3 + $0x8] sm:$0xff]
        %v480 = vld [vmem:[%s4] sm:$0x1]
        %v482 = vperm.slane %v480, 0
        %vm484 = vcmask 130048
        %v486 = vsel %vm484, %v446, 0
        %v489 = vsel %vm484, %v447, 0
        %v492 = vsel %vm484, %v448, 0
        %v495 = vsel %vm484, %v449, 0
        %v498 = vsel %vm484, %v450, 0
        %v501 = vsel %vm484, %v451, 0
        %v504 = vsel %vm484, %v452, 0
        %v507 = vsel %vm484, %v453, 0
        %v510 = vsel %vm484, %v454, 0
        %v513 = vsel %vm484, %v455, 0
        %v516 = vsel %vm484, %v456, 0
        %v519 = vsel %vm484, %v457, 0
        %v522 = vsel %vm484, %v458, 0
        %v525 = vsel %vm484, %v459, 0
        %v528 = vsel %vm484, %v460, 0
        %v531 = vsel %vm484, %v461, 0
        %v534 = vsel %vm484, %v462, 0
        %v537 = vsel %vm484, %v463, 0
        %v540 = vsel %vm484, %v464, 0
        %v543 = vsel %vm484, %v465, 0
        %v546 = vsel %vm484, %v466, 0
        %v549 = vsel %vm484, %v467, 0
        %v552 = vsel %vm484, %v468, 0
        %v555 = vsel %vm484, %v469, 0
        %v558 = vsel %vm484, %v470, 0
        %v561 = vsel %vm484, %v471, 0
        %v564 = vsel %vm484, %v472, 0
        %v567 = vsel %vm484, %v473, 0
        %v570 = vsel %vm484, %v474, 0
        %v573 = vsel %vm484, %v475, 0
        %v576 = vsel %vm484, %v476, 0
        %v579 = vsel %vm484, %v477, 0
        %581 = vmatpush.msra.mxu0 0.0
        %582 = vmatpush.msra.mxu0 0.0
        %583 = vmatpush.msra.mxu0 0.0
        %584 = vmatpush.msra.mxu0 0.0
        %585 = vmatpush.msra.mxu0 0.0
        %586 = vmatpush.msra.mxu0 0.0
        %587 = vmatpush.msra.mxu0 0.0
        %588 = vmatpush.msra.mxu0 0.0
        %589 = vmatpush.msra.mxu0 0.0
        %590 = vmatpush.msra.mxu0 0.0
        %591 = vmatpush.msra.mxu0 0.0
        %592 = vmatpush.msra.mxu0 0.0
        %593 = vmatpush.msra.mxu0 0.0
        %594 = vmatpush.msra.mxu0 0.0
        %595 = vmatpush.msra.mxu0 %v479
        %596 = vmatpush.msra.mxu0 %v478
        %597 = vmatmul.f32.gmra.mxu0 %v486
        %v598 = vpop.f32.mrf.mxu0
        %v599 = vadd.f32 %v482, %v598
        %600 = vmatmul.f32.gmra.mxu0 %v489
        %v601 = vpop.f32.mrf.mxu0
        %v602 = vadd.f32 %v482, %v601
        %603 = vmatmul.f32.gmra.mxu0 %v492
        %v604 = vpop.f32.mrf.mxu0
        %v605 = vadd.f32 %v482, %v604
        %606 = vmatmul.f32.gmra.mxu0 %v495
        %v607 = vpop.f32.mrf.mxu0
        %v608 = vadd.f32 %v482, %v607
        %609 = vmatmul.f32.gmra.mxu0 %v498
        %v610 = vpop.f32.mrf.mxu0
        %v611 = vadd.f32 %v482, %v610
        %612 = vmatmul.f32.gmra.mxu0 %v501
        %v613 = vpop.f32.mrf.mxu0
        %v614 = vadd.f32 %v482, %v613
        %615 = vmatmul.f32.gmra.mxu0 %v504
        %v616 = vpop.f32.mrf.mxu0
        %v617 = vadd.f32 %v482, %v616
        %618 = vmatmul.f32.gmra.mxu0 %v507
        %v619 = vpop.f32.mrf.mxu0
        %v620 = vadd.f32 %v482, %v619
        %621 = vmatmul.f32.gmra.mxu0 %v510
        %v622 = vpop.f32.mrf.mxu0
        %v623 = vadd.f32 %v482, %v622
        %624 = vmatmul.f32.gmra.mxu0 %v513
        %v625 = vpop.f32.mrf.mxu0
        %v626 = vadd.f32 %v482, %v625
        %627 = vmatmul.f32.gmra.mxu0 %v516
        %v628 = vpop.f32.mrf.mxu0
        %v629 = vadd.f32 %v482, %v628
        %630 = vmatmul.f32.gmra.mxu0 %v519
        %v631 = vpop.f32.mrf.mxu0
        %v632 = vadd.f32 %v482, %v631
        %633 = vmatmul.f32.gmra.mxu0 %v522
        %v634 = vpop.f32.mrf.mxu0
        %v635 = vadd.f32 %v482, %v634
        %636 = vmatmul.f32.gmra.mxu0 %v525
        %v637 = vpop.f32.mrf.mxu0
        %v638 = vadd.f32 %v482, %v637
        %639 = vmatmul.f32.gmra.mxu0 %v528
        %v640 = vpop.f32.mrf.mxu0
        %v641 = vadd.f32 %v482, %v640
        %642 = vmatmul.f32.gmra.mxu0 %v531
        %v643 = vpop.f32.mrf.mxu0
        %v644 = vadd.f32 %v482, %v643
        %645 = vmatmul.f32.gmra.mxu0 %v534
        %v646 = vpop.f32.mrf.mxu0
        %v647 = vadd.f32 %v482, %v646
        %648 = vmatmul.f32.gmra.mxu0 %v537
        %v649 = vpop.f32.mrf.mxu0
        %v650 = vadd.f32 %v482, %v649
        %651 = vmatmul.f32.gmra.mxu0 %v540
        %v652 = vpop.f32.mrf.mxu0
        %v653 = vadd.f32 %v482, %v652
        %654 = vmatmul.f32.gmra.mxu0 %v543
        %v655 = vpop.f32.mrf.mxu0
        %v656 = vadd.f32 %v482, %v655
        %657 = vmatmul.f32.gmra.mxu0 %v546
        %v658 = vpop.f32.mrf.mxu0
        %v659 = vadd.f32 %v482, %v658
        %660 = vmatmul.f32.gmra.mxu0 %v549
        %v661 = vpop.f32.mrf.mxu0
        %v662 = vadd.f32 %v482, %v661
        %663 = vmatmul.f32.gmra.mxu0 %v552
        %v664 = vpop.f32.mrf.mxu0
        %v665 = vadd.f32 %v482, %v664
        %666 = vmatmul.f32.gmra.mxu0 %v555
        %v667 = vpop.f32.mrf.mxu0
        %v668 = vadd.f32 %v482, %v667
        %669 = vmatmul.f32.gmra.mxu0 %v558
        %v670 = vpop.f32.mrf.mxu0
        %v671 = vadd.f32 %v482, %v670
        %672 = vmatmul.f32.gmra.mxu0 %v561
        %v673 = vpop.f32.mrf.mxu0
        %v674 = vadd.f32 %v482, %v673
        %675 = vmatmul.f32.gmra.mxu0 %v564
        %v676 = vpop.f32.mrf.mxu0
        %v677 = vadd.f32 %v482, %v676
        %678 = vmatmul.f32.gmra.mxu0 %v567
        %v679 = vpop.f32.mrf.mxu0
        %v680 = vadd.f32 %v482, %v679
        %681 = vmatmul.f32.gmra.mxu0 %v570
        %v682 = vpop.f32.mrf.mxu0
        %v683 = vadd.f32 %v482, %v682
        %684 = vmatmul.f32.gmra.mxu0 %v573
        %v685 = vpop.f32.mrf.mxu0
        %v686 = vadd.f32 %v482, %v685
        %687 = vmatmul.f32.gmra.mxu0 %v576
        %v688 = vpop.f32.mrf.mxu0
        %v689 = vadd.f32 %v482, %v688
        %690 = vmatmul.f32.gmra.mxu0 %v579
        %v691 = vpop.f32.mrf.mxu0
        %v692 = vadd.f32 %v482, %v691
        %693 = vdwg.mxu0
        %v694 = vmax.f32 %v599, 0.0
        %v695 = vmax.f32 %v602, 0.0
        %v696 = vmax.f32 %v605, 0.0
        %v697 = vmax.f32 %v608, 0.0
        %v698 = vmax.f32 %v611, 0.0
        %v699 = vmax.f32 %v614, 0.0
        %v700 = vmax.f32 %v617, 0.0
        %v701 = vmax.f32 %v620, 0.0
        %v702 = vmax.f32 %v623, 0.0
        %v703 = vmax.f32 %v626, 0.0
        %v704 = vmax.f32 %v629, 0.0
        %v705 = vmax.f32 %v632, 0.0
        %v706 = vmax.f32 %v635, 0.0
        %v707 = vmax.f32 %v638, 0.0
        %v708 = vmax.f32 %v641, 0.0
        %v709 = vmax.f32 %v644, 0.0
        %v710 = vmax.f32 %v647, 0.0
        %v711 = vmax.f32 %v650, 0.0
        %v712 = vmax.f32 %v653, 0.0
        %v713 = vmax.f32 %v656, 0.0
        %v714 = vmax.f32 %v659, 0.0
        %v715 = vmax.f32 %v662, 0.0
        %v716 = vmax.f32 %v665, 0.0
        %v717 = vmax.f32 %v668, 0.0
        %v718 = vmax.f32 %v671, 0.0
        %v719 = vmax.f32 %v674, 0.0
        %v720 = vmax.f32 %v677, 0.0
        %v721 = vmax.f32 %v680, 0.0
        %v722 = vmax.f32 %v683, 0.0
        %v723 = vmax.f32 %v686, 0.0
        %v724 = vmax.f32 %v689, 0.0
        %v725 = vmax.f32 %v692, 0.0
        %v726 = vld [vmem:[%s5] sm:$0x1]
        %v728 = vperm.slane %v726, 0
        %v730 = vmul.f32 %v694, %v728
        %v731 = vmul.f32 %v695, %v728
        %v732 = vmul.f32 %v696, %v728
        %v733 = vmul.f32 %v697, %v728
        %v734 = vmul.f32 %v698, %v728
        %v735 = vmul.f32 %v699, %v728
        %v736 = vmul.f32 %v700, %v728
        %v737 = vmul.f32 %v701, %v728
        %v738 = vmul.f32 %v702, %v728
        %v739 = vmul.f32 %v703, %v728
        %v740 = vmul.f32 %v704, %v728
        %v741 = vmul.f32 %v705, %v728
        %v742 = vmul.f32 %v706, %v728
        %v743 = vmul.f32 %v707, %v728
        %v744 = vmul.f32 %v708, %v728
        %v745 = vmul.f32 %v709, %v728
        %v746 = vmul.f32 %v710, %v728
        %v747 = vmul.f32 %v711, %v728
        %v748 = vmul.f32 %v712, %v728
        %v749 = vmul.f32 %v713, %v728
        %v750 = vmul.f32 %v714, %v728
        %v751 = vmul.f32 %v715, %v728
        %v752 = vmul.f32 %v716, %v728
        %v753 = vmul.f32 %v717, %v728
        %v754 = vmul.f32 %v718, %v728
        %v755 = vmul.f32 %v719, %v728
        %v756 = vmul.f32 %v720, %v728
        %v757 = vmul.f32 %v721, %v728
        %v758 = vmul.f32 %v722, %v728
        %v759 = vmul.f32 %v723, %v728
        %v760 = vmul.f32 %v724, %v728
        %v761 = vmul.f32 %v725, %v728
        %vm762 = vcmask 261120
        %v763 = vsel %vm762, %v730, 0.0
        %764 = vadd.xlane.f32.xlu0 %v763
        %v765 = vpop.xlane.xlu0 %764
        %v766 = vsel %vm762, %v731, 0.0
        %767 = vadd.xlane.f32.xlu0 %v766
        %v768 = vpop.xlane.xlu0 %767
        %v769 = vsel %vm762, %v732, 0.0
        %770 = vadd.xlane.f32.xlu0 %v769
        %v771 = vpop.xlane.xlu0 %770
        %v772 = vsel %vm762, %v733, 0.0
        %773 = vadd.xlane.f32.xlu0 %v772
        %v774 = vpop.xlane.xlu0 %773
        %v775 = vsel %vm762, %v734, 0.0
        %776 = vadd.xlane.f32.xlu0 %v775
        %v777 = vpop.xlane.xlu0 %776
        %v778 = vsel %vm762, %v735, 0.0
        %779 = vadd.xlane.f32.xlu0 %v778
        %v780 = vpop.xlane.xlu0 %779
        %v781 = vsel %vm762, %v736, 0.0
        %782 = vadd.xlane.f32.xlu0 %v781
        %v783 = vpop.xlane.xlu0 %782
        %v784 = vsel %vm762, %v737, 0.0
        %785 = vadd.xlane.f32.xlu0 %v784
        %v786 = vpop.xlane.xlu0 %785
        %v787 = vsel %vm762, %v738, 0.0
        %788 = vadd.xlane.f32.xlu0 %v787
        %v789 = vpop.xlane.xlu0 %788
        %v790 = vsel %vm762, %v739, 0.0
        %791 = vadd.xlane.f32.xlu0 %v790
        %v792 = vpop.xlane.xlu0 %791
        %v793 = vsel %vm762, %v740, 0.0
        %794 = vadd.xlane.f32.xlu0 %v793
        %v795 = vpop.xlane.xlu0 %794
        %v796 = vsel %vm762, %v741, 0.0
        %797 = vadd.xlane.f32.xlu0 %v796
        %v798 = vpop.xlane.xlu0 %797
        %v799 = vsel %vm762, %v742, 0.0
        %800 = vadd.xlane.f32.xlu0 %v799
        %v801 = vpop.xlane.xlu0 %800
        %v802 = vsel %vm762, %v743, 0.0
        %803 = vadd.xlane.f32.xlu0 %v802
        %v804 = vpop.xlane.xlu0 %803
        %v805 = vsel %vm762, %v744, 0.0
        %806 = vadd.xlane.f32.xlu0 %v805
        %v807 = vpop.xlane.xlu0 %806
        %v808 = vsel %vm762, %v745, 0.0
        %809 = vadd.xlane.f32.xlu0 %v808
        %v810 = vpop.xlane.xlu0 %809
        %v811 = vsel %vm762, %v746, 0.0
        %812 = vadd.xlane.f32.xlu0 %v811
        %v813 = vpop.xlane.xlu0 %812
        %v814 = vsel %vm762, %v747, 0.0
        %815 = vadd.xlane.f32.xlu0 %v814
        %v816 = vpop.xlane.xlu0 %815
        %v817 = vsel %vm762, %v748, 0.0
        %818 = vadd.xlane.f32.xlu0 %v817
        %v819 = vpop.xlane.xlu0 %818
        %v820 = vsel %vm762, %v749, 0.0
        %821 = vadd.xlane.f32.xlu0 %v820
        %v822 = vpop.xlane.xlu0 %821
        %v823 = vsel %vm762, %v750, 0.0
        %824 = vadd.xlane.f32.xlu0 %v823
        %v825 = vpop.xlane.xlu0 %824
        %v826 = vsel %vm762, %v751, 0.0
        %827 = vadd.xlane.f32.xlu0 %v826
        %v828 = vpop.xlane.xlu0 %827
        %v829 = vsel %vm762, %v752, 0.0
        %830 = vadd.xlane.f32.xlu0 %v829
        %v831 = vpop.xlane.xlu0 %830
        %v832 = vsel %vm762, %v753, 0.0
        %833 = vadd.xlane.f32.xlu0 %v832
        %v834 = vpop.xlane.xlu0 %833
        %v835 = vsel %vm762, %v754, 0.0
        %836 = vadd.xlane.f32.xlu0 %v835
        %v837 = vpop.xlane.xlu0 %836
        %v838 = vsel %vm762, %v755, 0.0
        %839 = vadd.xlane.f32.xlu0 %v838
        %v840 = vpop.xlane.xlu0 %839
        %v841 = vsel %vm762, %v756, 0.0
        %842 = vadd.xlane.f32.xlu0 %v841
        %v843 = vpop.xlane.xlu0 %842
        %v844 = vsel %vm762, %v757, 0.0
        %845 = vadd.xlane.f32.xlu0 %v844
        %v846 = vpop.xlane.xlu0 %845
        %v847 = vsel %vm762, %v758, 0.0
        %848 = vadd.xlane.f32.xlu0 %v847
        %v849 = vpop.xlane.xlu0 %848
        %v850 = vsel %vm762, %v759, 0.0
        %851 = vadd.xlane.f32.xlu0 %v850
        %v852 = vpop.xlane.xlu0 %851
        %v853 = vsel %vm762, %v760, 0.0
        %854 = vadd.xlane.f32.xlu0 %v853
        %v855 = vpop.xlane.xlu0 %854
        %v856 = vsel %vm762, %v761, 0.0
        %857 = vadd.xlane.f32.xlu0 %v856
        %v858 = vpop.xlane.xlu0 %857
        %v859 = vld [vmem:[#allocation3] sm:$0x1]
        %v861 = vperm.slane %v859, 0
        %v863 = vadd.f32 %v765, %v861
        %v864 = vadd.f32 %v768, %v861
        %v865 = vadd.f32 %v771, %v861
        %v866 = vadd.f32 %v774, %v861
        %v867 = vadd.f32 %v777, %v861
        %v868 = vadd.f32 %v780, %v861
        %v869 = vadd.f32 %v783, %v861
        %v870 = vadd.f32 %v786, %v861
        %v871 = vadd.f32 %v789, %v861
        %v872 = vadd.f32 %v792, %v861
        %v873 = vadd.f32 %v795, %v861
        %v874 = vadd.f32 %v798, %v861
        %v875 = vadd.f32 %v801, %v861
        %v876 = vadd.f32 %v804, %v861
        %v877 = vadd.f32 %v807, %v861
        %v878 = vadd.f32 %v810, %v861
        %v879 = vadd.f32 %v813, %v861
        %v880 = vadd.f32 %v816, %v861
        %v881 = vadd.f32 %v819, %v861
        %v882 = vadd.f32 %v822, %v861
        %v883 = vadd.f32 %v825, %v861
        %v884 = vadd.f32 %v828, %v861
        %v885 = vadd.f32 %v831, %v861
        %v886 = vadd.f32 %v834, %v861
        %v887 = vadd.f32 %v837, %v861
        %v888 = vadd.f32 %v840, %v861
        %v889 = vadd.f32 %v843, %v861
        %v890 = vadd.f32 %v846, %v861
        %v891 = vadd.f32 %v849, %v861
        %v892 = vadd.f32 %v852, %v861
        %v893 = vadd.f32 %v855, %v861
        %v894 = vadd.f32 %v858, %v861
        %v895 = vxor.u32 %v863, 2147483648
        %v896 = vxor.u32 %v864, 2147483648
        %v897 = vxor.u32 %v865, 2147483648
        %v898 = vxor.u32 %v866, 2147483648
        %v899 = vxor.u32 %v867, 2147483648
        %v900 = vxor.u32 %v868, 2147483648
        %v901 = vxor.u32 %v869, 2147483648
        %v902 = vxor.u32 %v870, 2147483648
        %v903 = vxor.u32 %v871, 2147483648
        %v904 = vxor.u32 %v872, 2147483648
        %v905 = vxor.u32 %v873, 2147483648
        %v906 = vxor.u32 %v874, 2147483648
        %v907 = vxor.u32 %v875, 2147483648
        %v908 = vxor.u32 %v876, 2147483648
        %v909 = vxor.u32 %v877, 2147483648
        %v910 = vxor.u32 %v878, 2147483648
        %v911 = vxor.u32 %v879, 2147483648
        %v912 = vxor.u32 %v880, 2147483648
        %v913 = vxor.u32 %v881, 2147483648
        %v914 = vxor.u32 %v882, 2147483648
        %v915 = vxor.u32 %v883, 2147483648
        %v916 = vxor.u32 %v884, 2147483648
        %v917 = vxor.u32 %v885, 2147483648
        %v918 = vxor.u32 %v886, 2147483648
        %v919 = vxor.u32 %v887, 2147483648
        %v920 = vxor.u32 %v888, 2147483648
        %v921 = vxor.u32 %v889, 2147483648
        %v922 = vxor.u32 %v890, 2147483648
        %v923 = vxor.u32 %v891, 2147483648
        %v924 = vxor.u32 %v892, 2147483648
        %v925 = vxor.u32 %v893, 2147483648
        %v926 = vxor.u32 %v894, 2147483648
        %v927 = vmul.f32 %v895, 1.442695
        %v928 = vpow.pop %v927
        %v929 = vmul.f32 %v896, 1.442695
        %v930 = vpow.pop %v929
        %v931 = vmul.f32 %v897, 1.442695
        %v932 = vpow.pop %v931
        %v933 = vmul.f32 %v898, 1.442695
        %v934 = vpow.pop %v933
        %v935 = vmul.f32 %v899, 1.442695
        %v936 = vpow.pop %v935
        %v937 = vmul.f32 %v900, 1.442695
        %v938 = vpow.pop %v937
        %v939 = vmul.f32 %v901, 1.442695
        %v940 = vpow.pop %v939
        %v941 = vmul.f32 %v902, 1.442695
        %v942 = vpow.pop %v941
        %v943 = vmul.f32 %v903, 1.442695
        %v944 = vpow.pop %v943
        %v945 = vmul.f32 %v904, 1.442695
        %v946 = vpow.pop %v945
        %v947 = vmul.f32 %v905, 1.442695
        %v948 = vpow.pop %v947
        %v949 = vmul.f32 %v906, 1.442695
        %v950 = vpow.pop %v949
        %v951 = vmul.f32 %v907, 1.442695
        %v952 = vpow.pop %v951
        %v953 = vmul.f32 %v908, 1.442695
        %v954 = vpow.pop %v953
        %v955 = vmul.f32 %v909, 1.442695
        %v956 = vpow.pop %v955
        %v957 = vmul.f32 %v910, 1.442695
        %v958 = vpow.pop %v957
        %v959 = vmul.f32 %v911, 1.442695
        %v960 = vpow.pop %v959
        %v961 = vmul.f32 %v912, 1.442695
        %v962 = vpow.pop %v961
        %v963 = vmul.f32 %v913, 1.442695
        %v964 = vpow.pop %v963
        %v965 = vmul.f32 %v914, 1.442695
        %v966 = vpow.pop %v965
        %v967 = vmul.f32 %v915, 1.442695
        %v968 = vpow.pop %v967
        %v969 = vmul.f32 %v916, 1.442695
        %v970 = vpow.pop %v969
        %v971 = vmul.f32 %v917, 1.442695
        %v972 = vpow.pop %v971
        %v973 = vmul.f32 %v918, 1.442695
        %v974 = vpow.pop %v973
        %v975 = vmul.f32 %v919, 1.442695
        %v976 = vpow.pop %v975
        %v977 = vmul.f32 %v920, 1.442695
        %v978 = vpow.pop %v977
        %v979 = vmul.f32 %v921, 1.442695
        %v980 = vpow.pop %v979
        %v981 = vmul.f32 %v922, 1.442695
        %v982 = vpow.pop %v981
        %v983 = vmul.f32 %v923, 1.442695
        %v984 = vpow.pop %v983
        %v985 = vmul.f32 %v924, 1.442695
        %v986 = vpow.pop %v985
        %v987 = vmul.f32 %v925, 1.442695
        %v988 = vpow.pop %v987
        %v989 = vmul.f32 %v926, 1.442695
        %v990 = vpow.pop %v989
        %v991 = vadd.f32 %v928, 1.0
        %v992 = vadd.f32 %v930, 1.0
        %v993 = vadd.f32 %v932, 1.0
        %v994 = vadd.f32 %v934, 1.0
        %v995 = vadd.f32 %v936, 1.0
        %v996 = vadd.f32 %v938, 1.0
        %v997 = vadd.f32 %v940, 1.0
        %v998 = vadd.f32 %v942, 1.0
        %v999 = vadd.f32 %v944, 1.0
        %v1000 = vadd.f32 %v946, 1.0
        %v1001 = vadd.f32 %v948, 1.0
        %v1002 = vadd.f32 %v950, 1.0
        %v1003 = vadd.f32 %v952, 1.0
        %v1004 = vadd.f32 %v954, 1.0
        %v1005 = vadd.f32 %v956, 1.0
        %v1006 = vadd.f32 %v958, 1.0
        %v1007 = vadd.f32 %v960, 1.0
        %v1008 = vadd.f32 %v962, 1.0
        %v1009 = vadd.f32 %v964, 1.0
        %v1010 = vadd.f32 %v966, 1.0
        %v1011 = vadd.f32 %v968, 1.0
        %v1012 = vadd.f32 %v970, 1.0
        %v1013 = vadd.f32 %v972, 1.0
        %v1014 = vadd.f32 %v974, 1.0
        %v1015 = vadd.f32 %v976, 1.0
        %v1016 = vadd.f32 %v978, 1.0
        %v1017 = vadd.f32 %v980, 1.0
        %v1018 = vadd.f32 %v982, 1.0
        %v1019 = vadd.f32 %v984, 1.0
        %v1020 = vadd.f32 %v986, 1.0
        %v1021 = vadd.f32 %v988, 1.0
        %v1022 = vadd.f32 %v990, 1.0
        %v1023 = vrcp.pop %v991
        %v1024 = vmul.f32 %v991, %v1023
        %v1025 = vsub.f32 1.0, %v1024
        %v1026 = vmul.f32 %v1023, %v1025
        %v1027 = vadd.f32 %v1023, %v1026
        %vm1028 = vweird.f32 %v991
        %vm1029 = vweird.f32 %v1023
        %vm1030 = vmor %vm1028, %vm1029
        %v1031 = vsel %vm1030, %v1023, %v1027
        %v1032 = vand.u32 2147483647, %v991
        %vm1033 = vcmp.eq.f32.partialorder %v1032, 8.507059e+37
        %v1034 = vand.u32 %v991, 2147483648
        %v1035 = vor.u32 1.1754944e-38, %v1034
        %v1036 = vsel %vm1033, %v1035, %v1031
        %v1037 = vmul.f32 1.0, %v1036
        %v1038 = vrcp.pop %v992
        %v1039 = vmul.f32 %v992, %v1038
        %v1040 = vsub.f32 1.0, %v1039
        %v1041 = vmul.f32 %v1038, %v1040
        %v1042 = vadd.f32 %v1038, %v1041
        %vm1043 = vweird.f32 %v992
        %vm1044 = vweird.f32 %v1038
        %vm1045 = vmor %vm1043, %vm1044
        %v1046 = vsel %vm1045, %v1038, %v1042
        %v1047 = vand.u32 2147483647, %v992
        %vm1048 = vcmp.eq.f32.partialorder %v1047, 8.507059e+37
        %v1049 = vand.u32 %v992, 2147483648
        %v1050 = vor.u32 1.1754944e-38, %v1049
        %v1051 = vsel %vm1048, %v1050, %v1046
        %v1052 = vmul.f32 1.0, %v1051
        %v1053 = vrcp.pop %v993
        %v1054 = vmul.f32 %v993, %v1053
        %v1055 = vsub.f32 1.0, %v1054
        %v1056 = vmul.f32 %v1053, %v1055
        %v1057 = vadd.f32 %v1053, %v1056
        %vm1058 = vweird.f32 %v993
        %vm1059 = vweird.f32 %v1053
        %vm1060 = vmor %vm1058, %vm1059
        %v1061 = vsel %vm1060, %v1053, %v1057
        %v1062 = vand.u32 2147483647, %v993
        %vm1063 = vcmp.eq.f32.partialorder %v1062, 8.507059e+37
        %v1064 = vand.u32 %v993, 2147483648
        %v1065 = vor.u32 1.1754944e-38, %v1064
        %v1066 = vsel %vm1063, %v1065, %v1061
        %v1067 = vmul.f32 1.0, %v1066
        %v1068 = vrcp.pop %v994
        %v1069 = vmul.f32 %v994, %v1068
        %v1070 = vsub.f32 1.0, %v1069
        %v1071 = vmul.f32 %v1068, %v1070
        %v1072 = vadd.f32 %v1068, %v1071
        %vm1073 = vweird.f32 %v994
        %vm1074 = vweird.f32 %v1068
        %vm1075 = vmor %vm1073, %vm1074
        %v1076 = vsel %vm1075, %v1068, %v1072
        %v1077 = vand.u32 2147483647, %v994
        %vm1078 = vcmp.eq.f32.partialorder %v1077, 8.507059e+37
        %v1079 = vand.u32 %v994, 2147483648
        %v1080 = vor.u32 1.1754944e-38, %v1079
        %v1081 = vsel %vm1078, %v1080, %v1076
        %v1082 = vmul.f32 1.0, %v1081
        %v1083 = vrcp.pop %v995
        %v1084 = vmul.f32 %v995, %v1083
        %v1085 = vsub.f32 1.0, %v1084
        %v1086 = vmul.f32 %v1083, %v1085
        %v1087 = vadd.f32 %v1083, %v1086
        %vm1088 = vweird.f32 %v995
        %vm1089 = vweird.f32 %v1083
        %vm1090 = vmor %vm1088, %vm1089
        %v1091 = vsel %vm1090, %v1083, %v1087
        %v1092 = vand.u32 2147483647, %v995
        %vm1093 = vcmp.eq.f32.partialorder %v1092, 8.507059e+37
        %v1094 = vand.u32 %v995, 2147483648
        %v1095 = vor.u32 1.1754944e-38, %v1094
        %v1096 = vsel %vm1093, %v1095, %v1091
        %v1097 = vmul.f32 1.0, %v1096
        %v1098 = vrcp.pop %v996
        %v1099 = vmul.f32 %v996, %v1098
        %v1100 = vsub.f32 1.0, %v1099
        %v1101 = vmul.f32 %v1098, %v1100
        %v1102 = vadd.f32 %v1098, %v1101
        %vm1103 = vweird.f32 %v996
        %vm1104 = vweird.f32 %v1098
        %vm1105 = vmor %vm1103, %vm1104
        %v1106 = vsel %vm1105, %v1098, %v1102
        %v1107 = vand.u32 2147483647, %v996
        %vm1108 = vcmp.eq.f32.partialorder %v1107, 8.507059e+37
        %v1109 = vand.u32 %v996, 2147483648
        %v1110 = vor.u32 1.1754944e-38, %v1109
        %v1111 = vsel %vm1108, %v1110, %v1106
        %v1112 = vmul.f32 1.0, %v1111
        %v1113 = vrcp.pop %v997
        %v1114 = vmul.f32 %v997, %v1113
        %v1115 = vsub.f32 1.0, %v1114
        %v1116 = vmul.f32 %v1113, %v1115
        %v1117 = vadd.f32 %v1113, %v1116
        %vm1118 = vweird.f32 %v997
        %vm1119 = vweird.f32 %v1113
        %vm1120 = vmor %vm1118, %vm1119
        %v1121 = vsel %vm1120, %v1113, %v1117
        %v1122 = vand.u32 2147483647, %v997
        %vm1123 = vcmp.eq.f32.partialorder %v1122, 8.507059e+37
        %v1124 = vand.u32 %v997, 2147483648
        %v1125 = vor.u32 1.1754944e-38, %v1124
        %v1126 = vsel %vm1123, %v1125, %v1121
        %v1127 = vmul.f32 1.0, %v1126
        %v1128 = vrcp.pop %v998
        %v1129 = vmul.f32 %v998, %v1128
        %v1130 = vsub.f32 1.0, %v1129
        %v1131 = vmul.f32 %v1128, %v1130
        %v1132 = vadd.f32 %v1128, %v1131
        %vm1133 = vweird.f32 %v998
        %vm1134 = vweird.f32 %v1128
        %vm1135 = vmor %vm1133, %vm1134
        %v1136 = vsel %vm1135, %v1128, %v1132
        %v1137 = vand.u32 2147483647, %v998
        %vm1138 = vcmp.eq.f32.partialorder %v1137, 8.507059e+37
        %v1139 = vand.u32 %v998, 2147483648
        %v1140 = vor.u32 1.1754944e-38, %v1139
        %v1141 = vsel %vm1138, %v1140, %v1136
        %v1142 = vmul.f32 1.0, %v1141
        %v1143 = vrcp.pop %v999
        %v1144 = vmul.f32 %v999, %v1143
        %v1145 = vsub.f32 1.0, %v1144
        %v1146 = vmul.f32 %v1143, %v1145
        %v1147 = vadd.f32 %v1143, %v1146
        %vm1148 = vweird.f32 %v999
        %vm1149 = vweird.f32 %v1143
        %vm1150 = vmor %vm1148, %vm1149
        %v1151 = vsel %vm1150, %v1143, %v1147
        %v1152 = vand.u32 2147483647, %v999
        %vm1153 = vcmp.eq.f32.partialorder %v1152, 8.507059e+37
        %v1154 = vand.u32 %v999, 2147483648
        %v1155 = vor.u32 1.1754944e-38, %v1154
        %v1156 = vsel %vm1153, %v1155, %v1151
        %v1157 = vmul.f32 1.0, %v1156
        %v1158 = vrcp.pop %v1000
        %v1159 = vmul.f32 %v1000, %v1158
        %v1160 = vsub.f32 1.0, %v1159
        %v1161 = vmul.f32 %v1158, %v1160
        %v1162 = vadd.f32 %v1158, %v1161
        %vm1163 = vweird.f32 %v1000
        %vm1164 = vweird.f32 %v1158
        %vm1165 = vmor %vm1163, %vm1164
        %v1166 = vsel %vm1165, %v1158, %v1162
        %v1167 = vand.u32 2147483647, %v1000
        %vm1168 = vcmp.eq.f32.partialorder %v1167, 8.507059e+37
        %v1169 = vand.u32 %v1000, 2147483648
        %v1170 = vor.u32 1.1754944e-38, %v1169
        %v1171 = vsel %vm1168, %v1170, %v1166
        %v1172 = vmul.f32 1.0, %v1171
        %v1173 = vrcp.pop %v1001
        %v1174 = vmul.f32 %v1001, %v1173
        %v1175 = vsub.f32 1.0, %v1174
        %v1176 = vmul.f32 %v1173, %v1175
        %v1177 = vadd.f32 %v1173, %v1176
        %vm1178 = vweird.f32 %v1001
        %vm1179 = vweird.f32 %v1173
        %vm1180 = vmor %vm1178, %vm1179
        %v1181 = vsel %vm1180, %v1173, %v1177
        %v1182 = vand.u32 2147483647, %v1001
        %vm1183 = vcmp.eq.f32.partialorder %v1182, 8.507059e+37
        %v1184 = vand.u32 %v1001, 2147483648
        %v1185 = vor.u32 1.1754944e-38, %v1184
        %v1186 = vsel %vm1183, %v1185, %v1181
        %v1187 = vmul.f32 1.0, %v1186
        %v1188 = vrcp.pop %v1002
        %v1189 = vmul.f32 %v1002, %v1188
        %v1190 = vsub.f32 1.0, %v1189
        %v1191 = vmul.f32 %v1188, %v1190
        %v1192 = vadd.f32 %v1188, %v1191
        %vm1193 = vweird.f32 %v1002
        %vm1194 = vweird.f32 %v1188
        %vm1195 = vmor %vm1193, %vm1194
        %v1196 = vsel %vm1195, %v1188, %v1192
        %v1197 = vand.u32 2147483647, %v1002
        %vm1198 = vcmp.eq.f32.partialorder %v1197, 8.507059e+37
        %v1199 = vand.u32 %v1002, 2147483648
        %v1200 = vor.u32 1.1754944e-38, %v1199
        %v1201 = vsel %vm1198, %v1200, %v1196
        %v1202 = vmul.f32 1.0, %v1201
        %v1203 = vrcp.pop %v1003
        %v1204 = vmul.f32 %v1003, %v1203
        %v1205 = vsub.f32 1.0, %v1204
        %v1206 = vmul.f32 %v1203, %v1205
        %v1207 = vadd.f32 %v1203, %v1206
        %vm1208 = vweird.f32 %v1003
        %vm1209 = vweird.f32 %v1203
        %vm1210 = vmor %vm1208, %vm1209
        %v1211 = vsel %vm1210, %v1203, %v1207
        %v1212 = vand.u32 2147483647, %v1003
        %vm1213 = vcmp.eq.f32.partialorder %v1212, 8.507059e+37
        %v1214 = vand.u32 %v1003, 2147483648
        %v1215 = vor.u32 1.1754944e-38, %v1214
        %v1216 = vsel %vm1213, %v1215, %v1211
        %v1217 = vmul.f32 1.0, %v1216
        %v1218 = vrcp.pop %v1004
        %v1219 = vmul.f32 %v1004, %v1218
        %v1220 = vsub.f32 1.0, %v1219
        %v1221 = vmul.f32 %v1218, %v1220
        %v1222 = vadd.f32 %v1218, %v1221
        %vm1223 = vweird.f32 %v1004
        %vm1224 = vweird.f32 %v1218
        %vm1225 = vmor %vm1223, %vm1224
        %v1226 = vsel %vm1225, %v1218, %v1222
        %v1227 = vand.u32 2147483647, %v1004
        %vm1228 = vcmp.eq.f32.partialorder %v1227, 8.507059e+37
        %v1229 = vand.u32 %v1004, 2147483648
        %v1230 = vor.u32 1.1754944e-38, %v1229
        %v1231 = vsel %vm1228, %v1230, %v1226
        %v1232 = vmul.f32 1.0, %v1231
        %v1233 = vrcp.pop %v1005
        %v1234 = vmul.f32 %v1005, %v1233
        %v1235 = vsub.f32 1.0, %v1234
        %v1236 = vmul.f32 %v1233, %v1235
        %v1237 = vadd.f32 %v1233, %v1236
        %vm1238 = vweird.f32 %v1005
        %vm1239 = vweird.f32 %v1233
        %vm1240 = vmor %vm1238, %vm1239
        %v1241 = vsel %vm1240, %v1233, %v1237
        %v1242 = vand.u32 2147483647, %v1005
        %vm1243 = vcmp.eq.f32.partialorder %v1242, 8.507059e+37
        %v1244 = vand.u32 %v1005, 2147483648
        %v1245 = vor.u32 1.1754944e-38, %v1244
        %v1246 = vsel %vm1243, %v1245, %v1241
        %v1247 = vmul.f32 1.0, %v1246
        %v1248 = vrcp.pop %v1006
        %v1249 = vmul.f32 %v1006, %v1248
        %v1250 = vsub.f32 1.0, %v1249
        %v1251 = vmul.f32 %v1248, %v1250
        %v1252 = vadd.f32 %v1248, %v1251
        %vm1253 = vweird.f32 %v1006
        %vm1254 = vweird.f32 %v1248
        %vm1255 = vmor %vm1253, %vm1254
        %v1256 = vsel %vm1255, %v1248, %v1252
        %v1257 = vand.u32 2147483647, %v1006
        %vm1258 = vcmp.eq.f32.partialorder %v1257, 8.507059e+37
        %v1259 = vand.u32 %v1006, 2147483648
        %v1260 = vor.u32 1.1754944e-38, %v1259
        %v1261 = vsel %vm1258, %v1260, %v1256
        %v1262 = vmul.f32 1.0, %v1261
        %v1263 = vrcp.pop %v1007
        %v1264 = vmul.f32 %v1007, %v1263
        %v1265 = vsub.f32 1.0, %v1264
        %v1266 = vmul.f32 %v1263, %v1265
        %v1267 = vadd.f32 %v1263, %v1266
        %vm1268 = vweird.f32 %v1007
        %vm1269 = vweird.f32 %v1263
        %vm1270 = vmor %vm1268, %vm1269
        %v1271 = vsel %vm1270, %v1263, %v1267
        %v1272 = vand.u32 2147483647, %v1007
        %vm1273 = vcmp.eq.f32.partialorder %v1272, 8.507059e+37
        %v1274 = vand.u32 %v1007, 2147483648
        %v1275 = vor.u32 1.1754944e-38, %v1274
        %v1276 = vsel %vm1273, %v1275, %v1271
        %v1277 = vmul.f32 1.0, %v1276
        %v1278 = vrcp.pop %v1008
        %v1279 = vmul.f32 %v1008, %v1278
        %v1280 = vsub.f32 1.0, %v1279
        %v1281 = vmul.f32 %v1278, %v1280
        %v1282 = vadd.f32 %v1278, %v1281
        %vm1283 = vweird.f32 %v1008
        %vm1284 = vweird.f32 %v1278
        %vm1285 = vmor %vm1283, %vm1284
        %v1286 = vsel %vm1285, %v1278, %v1282
        %v1287 = vand.u32 2147483647, %v1008
        %vm1288 = vcmp.eq.f32.partialorder %v1287, 8.507059e+37
        %v1289 = vand.u32 %v1008, 2147483648
        %v1290 = vor.u32 1.1754944e-38, %v1289
        %v1291 = vsel %vm1288, %v1290, %v1286
        %v1292 = vmul.f32 1.0, %v1291
        %v1293 = vrcp.pop %v1009
        %v1294 = vmul.f32 %v1009, %v1293
        %v1295 = vsub.f32 1.0, %v1294
        %v1296 = vmul.f32 %v1293, %v1295
        %v1297 = vadd.f32 %v1293, %v1296
        %vm1298 = vweird.f32 %v1009
        %vm1299 = vweird.f32 %v1293
        %vm1300 = vmor %vm1298, %vm1299
        %v1301 = vsel %vm1300, %v1293, %v1297
        %v1302 = vand.u32 2147483647, %v1009
        %vm1303 = vcmp.eq.f32.partialorder %v1302, 8.507059e+37
        %v1304 = vand.u32 %v1009, 2147483648
        %v1305 = vor.u32 1.1754944e-38, %v1304
        %v1306 = vsel %vm1303, %v1305, %v1301
        %v1307 = vmul.f32 1.0, %v1306
        %v1308 = vrcp.pop %v1010
        %v1309 = vmul.f32 %v1010, %v1308
        %v1310 = vsub.f32 1.0, %v1309
        %v1311 = vmul.f32 %v1308, %v1310
        %v1312 = vadd.f32 %v1308, %v1311
        %vm1313 = vweird.f32 %v1010
        %vm1314 = vweird.f32 %v1308
        %vm1315 = vmor %vm1313, %vm1314
        %v1316 = vsel %vm1315, %v1308, %v1312
        %v1317 = vand.u32 2147483647, %v1010
        %vm1318 = vcmp.eq.f32.partialorder %v1317, 8.507059e+37
        %v1319 = vand.u32 %v1010, 2147483648
        %v1320 = vor.u32 1.1754944e-38, %v1319
        %v1321 = vsel %vm1318, %v1320, %v1316
        %v1322 = vmul.f32 1.0, %v1321
        %v1323 = vrcp.pop %v1011
        %v1324 = vmul.f32 %v1011, %v1323
        %v1325 = vsub.f32 1.0, %v1324
        %v1326 = vmul.f32 %v1323, %v1325
        %v1327 = vadd.f32 %v1323, %v1326
        %vm1328 = vweird.f32 %v1011
        %vm1329 = vweird.f32 %v1323
        %vm1330 = vmor %vm1328, %vm1329
        %v1331 = vsel %vm1330, %v1323, %v1327
        %v1332 = vand.u32 2147483647, %v1011
        %vm1333 = vcmp.eq.f32.partialorder %v1332, 8.507059e+37
        %v1334 = vand.u32 %v1011, 2147483648
        %v1335 = vor.u32 1.1754944e-38, %v1334
        %v1336 = vsel %vm1333, %v1335, %v1331
        %v1337 = vmul.f32 1.0, %v1336
        %v1338 = vrcp.pop %v1012
        %v1339 = vmul.f32 %v1012, %v1338
        %v1340 = vsub.f32 1.0, %v1339
        %v1341 = vmul.f32 %v1338, %v1340
        %v1342 = vadd.f32 %v1338, %v1341
        %vm1343 = vweird.f32 %v1012
        %vm1344 = vweird.f32 %v1338
        %vm1345 = vmor %vm1343, %vm1344
        %v1346 = vsel %vm1345, %v1338, %v1342
        %v1347 = vand.u32 2147483647, %v1012
        %vm1348 = vcmp.eq.f32.partialorder %v1347, 8.507059e+37
        %v1349 = vand.u32 %v1012, 2147483648
        %v1350 = vor.u32 1.1754944e-38, %v1349
        %v1351 = vsel %vm1348, %v1350, %v1346
        %v1352 = vmul.f32 1.0, %v1351
        %v1353 = vrcp.pop %v1013
        %v1354 = vmul.f32 %v1013, %v1353
        %v1355 = vsub.f32 1.0, %v1354
        %v1356 = vmul.f32 %v1353, %v1355
        %v1357 = vadd.f32 %v1353, %v1356
        %vm1358 = vweird.f32 %v1013
        %vm1359 = vweird.f32 %v1353
        %vm1360 = vmor %vm1358, %vm1359
        %v1361 = vsel %vm1360, %v1353, %v1357
        %v1362 = vand.u32 2147483647, %v1013
        %vm1363 = vcmp.eq.f32.partialorder %v1362, 8.507059e+37
        %v1364 = vand.u32 %v1013, 2147483648
        %v1365 = vor.u32 1.1754944e-38, %v1364
        %v1366 = vsel %vm1363, %v1365, %v1361
        %v1367 = vmul.f32 1.0, %v1366
        %v1368 = vrcp.pop %v1014
        %v1369 = vmul.f32 %v1014, %v1368
        %v1370 = vsub.f32 1.0, %v1369
        %v1371 = vmul.f32 %v1368, %v1370
        %v1372 = vadd.f32 %v1368, %v1371
        %vm1373 = vweird.f32 %v1014
        %vm1374 = vweird.f32 %v1368
        %vm1375 = vmor %vm1373, %vm1374
        %v1376 = vsel %vm1375, %v1368, %v1372
        %v1377 = vand.u32 2147483647, %v1014
        %vm1378 = vcmp.eq.f32.partialorder %v1377, 8.507059e+37
        %v1379 = vand.u32 %v1014, 2147483648
        %v1380 = vor.u32 1.1754944e-38, %v1379
        %v1381 = vsel %vm1378, %v1380, %v1376
        %v1382 = vmul.f32 1.0, %v1381
        %v1383 = vrcp.pop %v1015
        %v1384 = vmul.f32 %v1015, %v1383
        %v1385 = vsub.f32 1.0, %v1384
        %v1386 = vmul.f32 %v1383, %v1385
        %v1387 = vadd.f32 %v1383, %v1386
        %vm1388 = vweird.f32 %v1015
        %vm1389 = vweird.f32 %v1383
        %vm1390 = vmor %vm1388, %vm1389
        %v1391 = vsel %vm1390, %v1383, %v1387
        %v1392 = vand.u32 2147483647, %v1015
        %vm1393 = vcmp.eq.f32.partialorder %v1392, 8.507059e+37
        %v1394 = vand.u32 %v1015, 2147483648
        %v1395 = vor.u32 1.1754944e-38, %v1394
        %v1396 = vsel %vm1393, %v1395, %v1391
        %v1397 = vmul.f32 1.0, %v1396
        %v1398 = vrcp.pop %v1016
        %v1399 = vmul.f32 %v1016, %v1398
        %v1400 = vsub.f32 1.0, %v1399
        %v1401 = vmul.f32 %v1398, %v1400
        %v1402 = vadd.f32 %v1398, %v1401
        %vm1403 = vweird.f32 %v1016
        %vm1404 = vweird.f32 %v1398
        %vm1405 = vmor %vm1403, %vm1404
        %v1406 = vsel %vm1405, %v1398, %v1402
        %v1407 = vand.u32 2147483647, %v1016
        %vm1408 = vcmp.eq.f32.partialorder %v1407, 8.507059e+37
        %v1409 = vand.u32 %v1016, 2147483648
        %v1410 = vor.u32 1.1754944e-38, %v1409
        %v1411 = vsel %vm1408, %v1410, %v1406
        %v1412 = vmul.f32 1.0, %v1411
        %v1413 = vrcp.pop %v1017
        %v1414 = vmul.f32 %v1017, %v1413
        %v1415 = vsub.f32 1.0, %v1414
        %v1416 = vmul.f32 %v1413, %v1415
        %v1417 = vadd.f32 %v1413, %v1416
        %vm1418 = vweird.f32 %v1017
        %vm1419 = vweird.f32 %v1413
        %vm1420 = vmor %vm1418, %vm1419
        %v1421 = vsel %vm1420, %v1413, %v1417
        %v1422 = vand.u32 2147483647, %v1017
        %vm1423 = vcmp.eq.f32.partialorder %v1422, 8.507059e+37
        %v1424 = vand.u32 %v1017, 2147483648
        %v1425 = vor.u32 1.1754944e-38, %v1424
        %v1426 = vsel %vm1423, %v1425, %v1421
        %v1427 = vmul.f32 1.0, %v1426
        %v1428 = vrcp.pop %v1018
        %v1429 = vmul.f32 %v1018, %v1428
        %v1430 = vsub.f32 1.0, %v1429
        %v1431 = vmul.f32 %v1428, %v1430
        %v1432 = vadd.f32 %v1428, %v1431
        %vm1433 = vweird.f32 %v1018
        %vm1434 = vweird.f32 %v1428
        %vm1435 = vmor %vm1433, %vm1434
        %v1436 = vsel %vm1435, %v1428, %v1432
        %v1437 = vand.u32 2147483647, %v1018
        %vm1438 = vcmp.eq.f32.partialorder %v1437, 8.507059e+37
        %v1439 = vand.u32 %v1018, 2147483648
        %v1440 = vor.u32 1.1754944e-38, %v1439
        %v1441 = vsel %vm1438, %v1440, %v1436
        %v1442 = vmul.f32 1.0, %v1441
        %v1443 = vrcp.pop %v1019
        %v1444 = vmul.f32 %v1019, %v1443
        %v1445 = vsub.f32 1.0, %v1444
        %v1446 = vmul.f32 %v1443, %v1445
        %v1447 = vadd.f32 %v1443, %v1446
        %vm1448 = vweird.f32 %v1019
        %vm1449 = vweird.f32 %v1443
        %vm1450 = vmor %vm1448, %vm1449
        %v1451 = vsel %vm1450, %v1443, %v1447
        %v1452 = vand.u32 2147483647, %v1019
        %vm1453 = vcmp.eq.f32.partialorder %v1452, 8.507059e+37
        %v1454 = vand.u32 %v1019, 2147483648
        %v1455 = vor.u32 1.1754944e-38, %v1454
        %v1456 = vsel %vm1453, %v1455, %v1451
        %v1457 = vmul.f32 1.0, %v1456
        %v1458 = vrcp.pop %v1020
        %v1459 = vmul.f32 %v1020, %v1458
        %v1460 = vsub.f32 1.0, %v1459
        %v1461 = vmul.f32 %v1458, %v1460
        %v1462 = vadd.f32 %v1458, %v1461
        %vm1463 = vweird.f32 %v1020
        %vm1464 = vweird.f32 %v1458
        %vm1465 = vmor %vm1463, %vm1464
        %v1466 = vsel %vm1465, %v1458, %v1462
        %v1467 = vand.u32 2147483647, %v1020
        %vm1468 = vcmp.eq.f32.partialorder %v1467, 8.507059e+37
        %v1469 = vand.u32 %v1020, 2147483648
        %v1470 = vor.u32 1.1754944e-38, %v1469
        %v1471 = vsel %vm1468, %v1470, %v1466
        %v1472 = vmul.f32 1.0, %v1471
        %v1473 = vrcp.pop %v1021
        %v1474 = vmul.f32 %v1021, %v1473
        %v1475 = vsub.f32 1.0, %v1474
        %v1476 = vmul.f32 %v1473, %v1475
        %v1477 = vadd.f32 %v1473, %v1476
        %vm1478 = vweird.f32 %v1021
        %vm1479 = vweird.f32 %v1473
        %vm1480 = vmor %vm1478, %vm1479
        %v1481 = vsel %vm1480, %v1473, %v1477
        %v1482 = vand.u32 2147483647, %v1021
        %vm1483 = vcmp.eq.f32.partialorder %v1482, 8.507059e+37
        %v1484 = vand.u32 %v1021, 2147483648
        %v1485 = vor.u32 1.1754944e-38, %v1484
        %v1486 = vsel %vm1483, %v1485, %v1481
        %v1487 = vmul.f32 1.0, %v1486
        %v1488 = vrcp.pop %v1022
        %v1489 = vmul.f32 %v1022, %v1488
        %v1490 = vsub.f32 1.0, %v1489
        %v1491 = vmul.f32 %v1488, %v1490
        %v1492 = vadd.f32 %v1488, %v1491
        %vm1493 = vweird.f32 %v1022
        %vm1494 = vweird.f32 %v1488
        %vm1495 = vmor %vm1493, %vm1494
        %v1496 = vsel %vm1495, %v1488, %v1492
        %v1497 = vand.u32 2147483647, %v1022
        %vm1498 = vcmp.eq.f32.partialorder %v1497, 8.507059e+37
        %v1499 = vand.u32 %v1022, 2147483648
        %v1500 = vor.u32 1.1754944e-38, %v1499
        %v1501 = vsel %vm1498, %v1500, %v1496
        %v1502 = vmul.f32 1.0, %v1501
        %v1503 = vld [vmem:[%s363] sm:$0xff]
        %v1504 = vld [vmem:[%s363 + $0x8] sm:$0xff]
        %v1505 = vld [vmem:[%s363 + $0x10] sm:$0xff]
        %v1506 = vld [vmem:[%s363 + $0x18] sm:$0xff]
        %v1507 = vld [vmem:[%s363 + $0x20] sm:$0xff]
        %v1508 = vld [vmem:[%s363 + $0x28] sm:$0xff]
        %v1509 = vld [vmem:[%s363 + $0x30] sm:$0xff]
        %v1510 = vld [vmem:[%s363 + $0x38] sm:$0xff]
        %v1511 = vld [vmem:[%s363 + $0x40] sm:$0xff]
        %v1512 = vld [vmem:[%s363 + $0x48] sm:$0xff]
        %v1513 = vld [vmem:[%s363 + $0x50] sm:$0xff]
        %v1514 = vld [vmem:[%s363 + $0x58] sm:$0xff]
        %v1515 = vld [vmem:[%s363 + $0x60] sm:$0xff]
        %v1516 = vld [vmem:[%s363 + $0x68] sm:$0xff]
        %v1517 = vld [vmem:[%s363 + $0x70] sm:$0xff]
        %v1518 = vld [vmem:[%s363 + $0x78] sm:$0xff]
        %v1519 = vld [vmem:[%s363 + $0x80] sm:$0xff]
        %v1520 = vld [vmem:[%s363 + $0x88] sm:$0xff]
        %v1521 = vld [vmem:[%s363 + $0x90] sm:$0xff]
        %v1522 = vld [vmem:[%s363 + $0x98] sm:$0xff]
        %v1523 = vld [vmem:[%s363 + $0xa0] sm:$0xff]
        %v1524 = vld [vmem:[%s363 + $0xa8] sm:$0xff]
        %v1525 = vld [vmem:[%s363 + $0xb0] sm:$0xff]
        %v1526 = vld [vmem:[%s363 + $0xb8] sm:$0xff]
        %v1527 = vld [vmem:[%s363 + $0xc0] sm:$0xff]
        %v1528 = vld [vmem:[%s363 + $0xc8] sm:$0xff]
        %v1529 = vld [vmem:[%s363 + $0xd0] sm:$0xff]
        %v1530 = vld [vmem:[%s363 + $0xd8] sm:$0xff]
        %v1531 = vld [vmem:[%s363 + $0xe0] sm:$0xff]
        %v1532 = vld [vmem:[%s363 + $0xe8] sm:$0xff]
        %v1533 = vld [vmem:[%s363 + $0xf0] sm:$0xff]
        %v1534 = vld [vmem:[%s363 + $0xf8] sm:$0xff]
        %1536 = vset.pattern.permute.xlu0 0
        %1537 = vperm.xlu0 %1536, %v1037
        %v1538 = vpop.permute.xlu0 %1537
        %1541 = vset.pattern.permute.xlu0 0
        %1542 = vperm.xlu0 %1541, %v1052
        %v1543 = vpop.permute.xlu0 %1542
        %1546 = vset.pattern.permute.xlu0 0
        %1547 = vperm.xlu0 %1546, %v1067
        %v1548 = vpop.permute.xlu0 %1547
        %1551 = vset.pattern.permute.xlu0 0
        %1552 = vperm.xlu0 %1551, %v1082
        %v1553 = vpop.permute.xlu0 %1552
        %1556 = vset.pattern.permute.xlu0 0
        %1557 = vperm.xlu0 %1556, %v1097
        %v1558 = vpop.permute.xlu0 %1557
        %1561 = vset.pattern.permute.xlu0 0
        %1562 = vperm.xlu0 %1561, %v1112
        %v1563 = vpop.permute.xlu0 %1562
        %1566 = vset.pattern.permute.xlu0 0
        %1567 = vperm.xlu0 %1566, %v1127
        %v1568 = vpop.permute.xlu0 %1567
        %1571 = vset.pattern.permute.xlu0 0
        %1572 = vperm.xlu0 %1571, %v1142
        %v1573 = vpop.permute.xlu0 %1572
        %1576 = vset.pattern.permute.xlu0 0
        %1577 = vperm.xlu0 %1576, %v1157
        %v1578 = vpop.permute.xlu0 %1577
        %1581 = vset.pattern.permute.xlu0 0
        %1582 = vperm.xlu0 %1581, %v1172
        %v1583 = vpop.permute.xlu0 %1582
        %1586 = vset.pattern.permute.xlu0 0
        %1587 = vperm.xlu0 %1586, %v1187
        %v1588 = vpop.permute.xlu0 %1587
        %1591 = vset.pattern.permute.xlu0 0
        %1592 = vperm.xlu0 %1591, %v1202
        %v1593 = vpop.permute.xlu0 %1592
        %1596 = vset.pattern.permute.xlu0 0
        %1597 = vperm.xlu0 %1596, %v1217
        %v1598 = vpop.permute.xlu0 %1597
        %1601 = vset.pattern.permute.xlu0 0
        %1602 = vperm.xlu0 %1601, %v1232
        %v1603 = vpop.permute.xlu0 %1602
        %1606 = vset.pattern.permute.xlu0 0
        %1607 = vperm.xlu0 %1606, %v1247
        %v1608 = vpop.permute.xlu0 %1607
        %1611 = vset.pattern.permute.xlu0 0
        %1612 = vperm.xlu0 %1611, %v1262
        %v1613 = vpop.permute.xlu0 %1612
        %1616 = vset.pattern.permute.xlu0 0
        %1617 = vperm.xlu0 %1616, %v1277
        %v1618 = vpop.permute.xlu0 %1617
        %1621 = vset.pattern.permute.xlu0 0
        %1622 = vperm.xlu0 %1621, %v1292
        %v1623 = vpop.permute.xlu0 %1622
        %1626 = vset.pattern.permute.xlu0 0
        %1627 = vperm.xlu0 %1626, %v1307
        %v1628 = vpop.permute.xlu0 %1627
        %1631 = vset.pattern.permute.xlu0 0
        %1632 = vperm.xlu0 %1631, %v1322
        %v1633 = vpop.permute.xlu0 %1632
        %1636 = vset.pattern.permute.xlu0 0
        %1637 = vperm.xlu0 %1636, %v1337
        %v1638 = vpop.permute.xlu0 %1637
        %1641 = vset.pattern.permute.xlu0 0
        %1642 = vperm.xlu0 %1641, %v1352
        %v1643 = vpop.permute.xlu0 %1642
        %1646 = vset.pattern.permute.xlu0 0
        %1647 = vperm.xlu0 %1646, %v1367
        %v1648 = vpop.permute.xlu0 %1647
        %1651 = vset.pattern.permute.xlu0 0
        %1652 = vperm.xlu0 %1651, %v1382
        %v1653 = vpop.permute.xlu0 %1652
        %1656 = vset.pattern.permute.xlu0 0
        %1657 = vperm.xlu0 %1656, %v1397
        %v1658 = vpop.permute.xlu0 %1657
        %1661 = vset.pattern.permute.xlu0 0
        %1662 = vperm.xlu0 %1661, %v1412
        %v1663 = vpop.permute.xlu0 %1662
        %1666 = vset.pattern.permute.xlu0 0
        %1667 = vperm.xlu0 %1666, %v1427
        %v1668 = vpop.permute.xlu0 %1667
        %1671 = vset.pattern.permute.xlu0 0
        %1672 = vperm.xlu0 %1671, %v1442
        %v1673 = vpop.permute.xlu0 %1672
        %1676 = vset.pattern.permute.xlu0 0
        %1677 = vperm.xlu0 %1676, %v1457
        %v1678 = vpop.permute.xlu0 %1677
        %1681 = vset.pattern.permute.xlu0 0
        %1682 = vperm.xlu0 %1681, %v1472
        %v1683 = vpop.permute.xlu0 %1682
        %1686 = vset.pattern.permute.xlu0 0
        %1687 = vperm.xlu0 %1686, %v1487
        %v1688 = vpop.permute.xlu0 %1687
        %1691 = vset.pattern.permute.xlu0 0
        %1692 = vperm.xlu0 %1691, %v1502
        %v1693 = vpop.permute.xlu0 %1692
        %v1695 = vmul.f32 %v1538, %v1503
        %v1696 = vmul.f32 %v1543, %v1504
        %v1697 = vmul.f32 %v1548, %v1505
        %v1698 = vmul.f32 %v1553, %v1506
        %v1699 = vmul.f32 %v1558, %v1507
        %v1700 = vmul.f32 %v1563, %v1508
        %v1701 = vmul.f32 %v1568, %v1509
        %v1702 = vmul.f32 %v1573, %v1510
        %v1703 = vmul.f32 %v1578, %v1511
        %v1704 = vmul.f32 %v1583, %v1512
        %v1705 = vmul.f32 %v1588, %v1513
        %v1706 = vmul.f32 %v1593, %v1514
        %v1707 = vmul.f32 %v1598, %v1515
        %v1708 = vmul.f32 %v1603, %v1516
        %v1709 = vmul.f32 %v1608, %v1517
        %v1710 = vmul.f32 %v1613, %v1518
        %v1711 = vmul.f32 %v1618, %v1519
        %v1712 = vmul.f32 %v1623, %v1520
        %v1713 = vmul.f32 %v1628, %v1521
        %v1714 = vmul.f32 %v1633, %v1522
        %v1715 = vmul.f32 %v1638, %v1523
        %v1716 = vmul.f32 %v1643, %v1524
        %v1717 = vmul.f32 %v1648, %v1525
        %v1718 = vmul.f32 %v1653, %v1526
        %v1719 = vmul.f32 %v1658, %v1527
        %v1720 = vmul.f32 %v1663, %v1528
        %v1721 = vmul.f32 %v1668, %v1529
        %v1722 = vmul.f32 %v1673, %v1530
        %v1723 = vmul.f32 %v1678, %v1531
        %v1724 = vmul.f32 %v1683, %v1532
        %v1725 = vmul.f32 %v1688, %v1533
        %v1726 = vmul.f32 %v1693, %v1534
        %1727 = vst.msk [vmem:[#allocation2] sm:$0xff] %vm762, %v1695
        %1728 = vst.msk [vmem:[#allocation2 + $0x8] sm:$0xff] %vm762, %v1696
        %1729 = vst.msk [vmem:[#allocation2 + $0x10] sm:$0xff] %vm762, %v1697
        %1730 = vst.msk [vmem:[#allocation2 + $0x18] sm:$0xff] %vm762, %v1698
        %1731 = vst.msk [vmem:[#allocation2 + $0x20] sm:$0xff] %vm762, %v1699
        %1732 = vst.msk [vmem:[#allocation2 + $0x28] sm:$0xff] %vm762, %v1700
        %1733 = vst.msk [vmem:[#allocation2 + $0x30] sm:$0xff] %vm762, %v1701
        %1734 = vst.msk [vmem:[#allocation2 + $0x38] sm:$0xff] %vm762, %v1702
        %1735 = vst.msk [vmem:[#allocation2 + $0x40] sm:$0xff] %vm762, %v1703
        %1736 = vst.msk [vmem:[#allocation2 + $0x48] sm:$0xff] %vm762, %v1704
        %1737 = vst.msk [vmem:[#allocation2 + $0x50] sm:$0xff] %vm762, %v1705
        %1738 = vst.msk [vmem:[#allocation2 + $0x58] sm:$0xff] %vm762, %v1706
        %1739 = vst.msk [vmem:[#allocation2 + $0x60] sm:$0xff] %vm762, %v1707
        %1740 = vst.msk [vmem:[#allocation2 + $0x68] sm:$0xff] %vm762, %v1708
        %1741 = vst.msk [vmem:[#allocation2 + $0x70] sm:$0xff] %vm762, %v1709
        %1742 = vst.msk [vmem:[#allocation2 + $0x78] sm:$0xff] %vm762, %v1710
        %1743 = vst.msk [vmem:[#allocation2 + $0x80] sm:$0xff] %vm762, %v1711
        %1744 = vst.msk [vmem:[#allocation2 + $0x88] sm:$0xff] %vm762, %v1712
        %1745 = vst.msk [vmem:[#allocation2 + $0x90] sm:$0xff] %vm762, %v1713
        %1746 = vst.msk [vmem:[#allocation2 + $0x98] sm:$0xff] %vm762, %v1714
        %1747 = vst.msk [vmem:[#allocation2 + $0xa0] sm:$0xff] %vm762, %v1715
        %1748 = vst.msk [vmem:[#allocation2 + $0xa8] sm:$0xff] %vm762, %v1716
        %1749 = vst.msk [vmem:[#allocation2 + $0xb0] sm:$0xff] %vm762, %v1717
        %1750 = vst.msk [vmem:[#allocation2 + $0xb8] sm:$0xff] %vm762, %v1718
        %1751 = vst.msk [vmem:[#allocation2 + $0xc0] sm:$0xff] %vm762, %v1719
        %1752 = vst.msk [vmem:[#allocation2 + $0xc8] sm:$0xff] %vm762, %v1720
        %1753 = vst.msk [vmem:[#allocation2 + $0xd0] sm:$0xff] %vm762, %v1721
        %1754 = vst.msk [vmem:[#allocation2 + $0xd8] sm:$0xff] %vm762, %v1722
        %1755 = vst.msk [vmem:[#allocation2 + $0xe0] sm:$0xff] %vm762, %v1723
        %1756 = vst.msk [vmem:[#allocation2 + $0xe8] sm:$0xff] %vm762, %v1724
        %1757 = vst.msk [vmem:[#allocation2 + $0xf0] sm:$0xff] %vm762, %v1725
        %1758 = vst.msk [vmem:[#allocation2 + $0xf8] sm:$0xff] %vm762, %v1726
        %1791 = vrot.lane.b32.xlu0 %v1503, 32
        %v1792 = vpop.permute.xlu0 %1791
        %1793 = vrot.lane.b32.xlu0 %v1504, 32
        %v1794 = vpop.permute.xlu0 %1793
        %1795 = vrot.lane.b32.xlu0 %v1505, 32
        %v1796 = vpop.permute.xlu0 %1795
        %1797 = vrot.lane.b32.xlu0 %v1506, 32
        %v1798 = vpop.permute.xlu0 %1797
        %1799 = vrot.lane.b32.xlu0 %v1507, 32
        %v1800 = vpop.permute.xlu0 %1799
        %1801 = vrot.lane.b32.xlu0 %v1508, 32
        %v1802 = vpop.permute.xlu0 %1801
        %1803 = vrot.lane.b32.xlu0 %v1509, 32
        %v1804 = vpop.permute.xlu0 %1803
        %1805 = vrot.lane.b32.xlu0 %v1510, 32
        %v1806 = vpop.permute.xlu0 %1805
        %1807 = vrot.lane.b32.xlu0 %v1511, 32
        %v1808 = vpop.permute.xlu0 %1807
        %1809 = vrot.lane.b32.xlu0 %v1512, 32
        %v1810 = vpop.permute.xlu0 %1809
        %1811 = vrot.lane.b32.xlu0 %v1513, 32
        %v1812 = vpop.permute.xlu0 %1811
        %1813 = vrot.lane.b32.xlu0 %v1514, 32
        %v1814 = vpop.permute.xlu0 %1813
        %1815 = vrot.lane.b32.xlu0 %v1515, 32
        %v1816 = vpop.permute.xlu0 %1815
        %1817 = vrot.lane.b32.xlu0 %v1516, 32
        %v1818 = vpop.permute.xlu0 %1817
        %1819 = vrot.lane.b32.xlu0 %v1517, 32
        %v1820 = vpop.permute.xlu0 %1819
        %1821 = vrot.lane.b32.xlu0 %v1518, 32
        %v1822 = vpop.permute.xlu0 %1821
        %1823 = vrot.lane.b32.xlu0 %v1519, 32
        %v1824 = vpop.permute.xlu0 %1823
        %1825 = vrot.lane.b32.xlu0 %v1520, 32
        %v1826 = vpop.permute.xlu0 %1825
        %1827 = vrot.lane.b32.xlu0 %v1521, 32
        %v1828 = vpop.permute.xlu0 %1827
        %1829 = vrot.lane.b32.xlu0 %v1522, 32
        %v1830 = vpop.permute.xlu0 %1829
        %1831 = vrot.lane.b32.xlu0 %v1523, 32
        %v1832 = vpop.permute.xlu0 %1831
        %1833 = vrot.lane.b32.xlu0 %v1524, 32
        %v1834 = vpop.permute.xlu0 %1833
        %1835 = vrot.lane.b32.xlu0 %v1525, 32
        %v1836 = vpop.permute.xlu0 %1835
        %1837 = vrot.lane.b32.xlu0 %v1526, 32
        %v1838 = vpop.permute.xlu0 %1837
        %1839 = vrot.lane.b32.xlu0 %v1527, 32
        %v1840 = vpop.permute.xlu0 %1839
        %1841 = vrot.lane.b32.xlu0 %v1528, 32
        %v1842 = vpop.permute.xlu0 %1841
        %1843 = vrot.lane.b32.xlu0 %v1529, 32
        %v1844 = vpop.permute.xlu0 %1843
        %1845 = vrot.lane.b32.xlu0 %v1530, 32
        %v1846 = vpop.permute.xlu0 %1845
        %1847 = vrot.lane.b32.xlu0 %v1531, 32
        %v1848 = vpop.permute.xlu0 %1847
        %1849 = vrot.lane.b32.xlu0 %v1532, 32
        %v1850 = vpop.permute.xlu0 %1849
        %1851 = vrot.lane.b32.xlu0 %v1533, 32
        %v1852 = vpop.permute.xlu0 %1851
        %1853 = vrot.lane.b32.xlu0 %v1534, 32
        %v1854 = vpop.permute.xlu0 %1853
        %vm1887 = vcmask 523520
        %1888 = vst.msk [vmem:[#allocation2] sm:$0xff] %vm1887, %v1792
        %1889 = vst.msk [vmem:[#allocation2 + $0x8] sm:$0xff] %vm1887, %v1794
        %1890 = vst.msk [vmem:[#allocation2 + $0x10] sm:$0xff] %vm1887, %v1796
        %1891 = vst.msk [vmem:[#allocation2 + $0x18] sm:$0xff] %vm1887, %v1798
        %1892 = vst.msk [vmem:[#allocation2 + $0x20] sm:$0xff] %vm1887, %v1800
        %1893 = vst.msk [vmem:[#allocation2 + $0x28] sm:$0xff] %vm1887, %v1802
        %1894 = vst.msk [vmem:[#allocation2 + $0x30] sm:$0xff] %vm1887, %v1804
        %1895 = vst.msk [vmem:[#allocation2 + $0x38] sm:$0xff] %vm1887, %v1806
        %1896 = vst.msk [vmem:[#allocation2 + $0x40] sm:$0xff] %vm1887, %v1808
        %1897 = vst.msk [vmem:[#allocation2 + $0x48] sm:$0xff] %vm1887, %v1810
        %1898 = vst.msk [vmem:[#allocation2 + $0x50] sm:$0xff] %vm1887, %v1812
        %1899 = vst.msk [vmem:[#allocation2 + $0x58] sm:$0xff] %vm1887, %v1814
        %1900 = vst.msk [vmem:[#allocation2 + $0x60] sm:$0xff] %vm1887, %v1816
        %1901 = vst.msk [vmem:[#allocation2 + $0x68] sm:$0xff] %vm1887, %v1818
        %1902 = vst.msk [vmem:[#allocation2 + $0x70] sm:$0xff] %vm1887, %v1820
        %1903 = vst.msk [vmem:[#allocation2 + $0x78] sm:$0xff] %vm1887, %v1822
        %1904 = vst.msk [vmem:[#allocation2 + $0x80] sm:$0xff] %vm1887, %v1824
        %1905 = vst.msk [vmem:[#allocation2 + $0x88] sm:$0xff] %vm1887, %v1826
        %1906 = vst.msk [vmem:[#allocation2 + $0x90] sm:$0xff] %vm1887, %v1828
        %1907 = vst.msk [vmem:[#allocation2 + $0x98] sm:$0xff] %vm1887, %v1830
        %1908 = vst.msk [vmem:[#allocation2 + $0xa0] sm:$0xff] %vm1887, %v1832
        %1909 = vst.msk [vmem:[#allocation2 + $0xa8] sm:$0xff] %vm1887, %v1834
        %1910 = vst.msk [vmem:[#allocation2 + $0xb0] sm:$0xff] %vm1887, %v1836
        %1911 = vst.msk [vmem:[#allocation2 + $0xb8] sm:$0xff] %vm1887, %v1838
        %1912 = vst.msk [vmem:[#allocation2 + $0xc0] sm:$0xff] %vm1887, %v1840
        %1913 = vst.msk [vmem:[#allocation2 + $0xc8] sm:$0xff] %vm1887, %v1842
        %1914 = vst.msk [vmem:[#allocation2 + $0xd0] sm:$0xff] %vm1887, %v1844
        %1915 = vst.msk [vmem:[#allocation2 + $0xd8] sm:$0xff] %vm1887, %v1846
        %1916 = vst.msk [vmem:[#allocation2 + $0xe0] sm:$0xff] %vm1887, %v1848
        %1917 = vst.msk [vmem:[#allocation2 + $0xe8] sm:$0xff] %vm1887, %v1850
        %1918 = vst.msk [vmem:[#allocation2 + $0xf0] sm:$0xff] %vm1887, %v1852
        %1919 = vst.msk [vmem:[#allocation2 + $0xf8] sm:$0xff] %vm1887, %v1854
        %1920 = vrot.lane.b32.xlu0 %v1037, 64
        %v1921 = vpop.permute.xlu0 %1920
        %1922 = vrot.lane.b32.xlu0 %v1052, 64
        %v1923 = vpop.permute.xlu0 %1922
        %1924 = vrot.lane.b32.xlu0 %v1067, 64
        %v1925 = vpop.permute.xlu0 %1924
        %1926 = vrot.lane.b32.xlu0 %v1082, 64
        %v1927 = vpop.permute.xlu0 %1926
        %1928 = vrot.lane.b32.xlu0 %v1097, 64
        %v1929 = vpop.permute.xlu0 %1928
        %1930 = vrot.lane.b32.xlu0 %v1112, 64
        %v1931 = vpop.permute.xlu0 %1930
        %1932 = vrot.lane.b32.xlu0 %v1127, 64
        %v1933 = vpop.permute.xlu0 %1932
        %1934 = vrot.lane.b32.xlu0 %v1142, 64
        %v1935 = vpop.permute.xlu0 %1934
        %1936 = vrot.lane.b32.xlu0 %v1157, 64
        %v1937 = vpop.permute.xlu0 %1936
        %1938 = vrot.lane.b32.xlu0 %v1172, 64
        %v1939 = vpop.permute.xlu0 %1938
        %1940 = vrot.lane.b32.xlu0 %v1187, 64
        %v1941 = vpop.permute.xlu0 %1940
        %1942 = vrot.lane.b32.xlu0 %v1202, 64
        %v1943 = vpop.permute.xlu0 %1942
        %1944 = vrot.lane.b32.xlu0 %v1217, 64
        %v1945 = vpop.permute.xlu0 %1944
        %1946 = vrot.lane.b32.xlu0 %v1232, 64
        %v1947 = vpop.permute.xlu0 %1946
        %1948 = vrot.lane.b32.xlu0 %v1247, 64
        %v1949 = vpop.permute.xlu0 %1948
        %1950 = vrot.lane.b32.xlu0 %v1262, 64
        %v1951 = vpop.permute.xlu0 %1950
        %1952 = vrot.lane.b32.xlu0 %v1277, 64
        %v1953 = vpop.permute.xlu0 %1952
        %1954 = vrot.lane.b32.xlu0 %v1292, 64
        %v1955 = vpop.permute.xlu0 %1954
        %1956 = vrot.lane.b32.xlu0 %v1307, 64
        %v1957 = vpop.permute.xlu0 %1956
        %1958 = vrot.lane.b32.xlu0 %v1322, 64
        %v1959 = vpop.permute.xlu0 %1958
        %1960 = vrot.lane.b32.xlu0 %v1337, 64
        %v1961 = vpop.permute.xlu0 %1960
        %1962 = vrot.lane.b32.xlu0 %v1352, 64
        %v1963 = vpop.permute.xlu0 %1962
        %1964 = vrot.lane.b32.xlu0 %v1367, 64
        %v1965 = vpop.permute.xlu0 %1964
        %1966 = vrot.lane.b32.xlu0 %v1382, 64
        %v1967 = vpop.permute.xlu0 %1966
        %1968 = vrot.lane.b32.xlu0 %v1397, 64
        %v1969 = vpop.permute.xlu0 %1968
        %1970 = vrot.lane.b32.xlu0 %v1412, 64
        %v1971 = vpop.permute.xlu0 %1970
        %1972 = vrot.lane.b32.xlu0 %v1427, 64
        %v1973 = vpop.permute.xlu0 %1972
        %1974 = vrot.lane.b32.xlu0 %v1442, 64
        %v1975 = vpop.permute.xlu0 %1974
        %1976 = vrot.lane.b32.xlu0 %v1457, 64
        %v1977 = vpop.permute.xlu0 %1976
        %1978 = vrot.lane.b32.xlu0 %v1472, 64
        %v1979 = vpop.permute.xlu0 %1978
        %1980 = vrot.lane.b32.xlu0 %v1487, 64
        %v1981 = vpop.permute.xlu0 %1980
        %1982 = vrot.lane.b32.xlu0 %v1502, 64
        %v1983 = vpop.permute.xlu0 %1982
        %vm2016 = vcmask 531968
        %2017 = vst.msk [vmem:[#allocation2] sm:$0xff] %vm2016, %v1921
        %2018 = vst.msk [vmem:[#allocation2 + $0x8] sm:$0xff] %vm2016, %v1923
        %2019 = vst.msk [vmem:[#allocation2 + $0x10] sm:$0xff] %vm2016, %v1925
        %2020 = vst.msk [vmem:[#allocation2 + $0x18] sm:$0xff] %vm2016, %v1927
        %2021 = vst.msk [vmem:[#allocation2 + $0x20] sm:$0xff] %vm2016, %v1929
        %2022 = vst.msk [vmem:[#allocation2 + $0x28] sm:$0xff] %vm2016, %v1931
        %2023 = vst.msk [vmem:[#allocation2 + $0x30] sm:$0xff] %vm2016, %v1933
        %2024 = vst.msk [vmem:[#allocation2 + $0x38] sm:$0xff] %vm2016, %v1935
        %2025 = vst.msk [vmem:[#allocation2 + $0x40] sm:$0xff] %vm2016, %v1937
        %2026 = vst.msk [vmem:[#allocation2 + $0x48] sm:$0xff] %vm2016, %v1939
        %2027 = vst.msk [vmem:[#allocation2 + $0x50] sm:$0xff] %vm2016, %v1941
        %2028 = vst.msk [vmem:[#allocation2 + $0x58] sm:$0xff] %vm2016, %v1943
        %2029 = vst.msk [vmem:[#allocation2 + $0x60] sm:$0xff] %vm2016, %v1945
        %2030 = vst.msk [vmem:[#allocation2 + $0x68] sm:$0xff] %vm2016, %v1947
        %2031 = vst.msk [vmem:[#allocation2 + $0x70] sm:$0xff] %vm2016, %v1949
        %2032 = vst.msk [vmem:[#allocation2 + $0x78] sm:$0xff] %vm2016, %v1951
        %2033 = vst.msk [vmem:[#allocation2 + $0x80] sm:$0xff] %vm2016, %v1953
        %2034 = vst.msk [vmem:[#allocation2 + $0x88] sm:$0xff] %vm2016, %v1955
        %2035 = vst.msk [vmem:[#allocation2 + $0x90] sm:$0xff] %vm2016, %v1957
        %2036 = vst.msk [vmem:[#allocation2 + $0x98] sm:$0xff] %vm2016, %v1959
        %2037 = vst.msk [vmem:[#allocation2 + $0xa0] sm:$0xff] %vm2016, %v1961
        %2038 = vst.msk [vmem:[#allocation2 + $0xa8] sm:$0xff] %vm2016, %v1963
        %2039 = vst.msk [vmem:[#allocation2 + $0xb0] sm:$0xff] %vm2016, %v1965
        %2040 = vst.msk [vmem:[#allocation2 + $0xb8] sm:$0xff] %vm2016, %v1967
        %2041 = vst.msk [vmem:[#allocation2 + $0xc0] sm:$0xff] %vm2016, %v1969
        %2042 = vst.msk [vmem:[#allocation2 + $0xc8] sm:$0xff] %vm2016, %v1971
        %2043 = vst.msk [vmem:[#allocation2 + $0xd0] sm:$0xff] %vm2016, %v1973
        %2044 = vst.msk [vmem:[#allocation2 + $0xd8] sm:$0xff] %vm2016, %v1975
        %2045 = vst.msk [vmem:[#allocation2 + $0xe0] sm:$0xff] %vm2016, %v1977
        %2046 = vst.msk [vmem:[#allocation2 + $0xe8] sm:$0xff] %vm2016, %v1979
        %2047 = vst.msk [vmem:[#allocation2 + $0xf0] sm:$0xff] %vm2016, %v1981
        %2048 = vst.msk [vmem:[#allocation2 + $0xf8] sm:$0xff] %vm2016, %v1983
        %v2049 = vlaneseq
        %v2050 = vshrl.u32 %v2049, 7
        %v2051 = vld [vmem:[%s372] sm:$0x3]
        %v2052 = vperm.slane %v2051, 0
        %v2053 = vperm.slane %v2051, 1
        %vm2054 = vcmp.eq.s32.totalorder %v2050, %v2052
        %vm2055 = vcmp.eq.s32.totalorder %v2050, %v2053
        %v2056 = vsel %vm2054, 1, 0
        %v2057 = vsel %vm2055, 1, 0
        %v2058 = vcvt.s32.f32 %v2056
        %v2059 = vcvt.s32.f32 %v2057
        %v2060 = vld [vmem:[%s346] sm:$0xff]
        %v2061 = vld [vmem:[#allocation2] sm:$0xff]
        %v2062 = vld [vmem:[#allocation2 + $0x8] sm:$0xff]
        %v2063 = vld [vmem:[#allocation2 + $0x10] sm:$0xff]
        %v2064 = vld [vmem:[#allocation2 + $0x18] sm:$0xff]
        %v2065 = vld [vmem:[#allocation2 + $0x20] sm:$0xff]
        %v2066 = vld [vmem:[#allocation2 + $0x28] sm:$0xff]
        %v2067 = vld [vmem:[#allocation2 + $0x30] sm:$0xff]
        %v2068 = vld [vmem:[#allocation2 + $0x38] sm:$0xff]
        %v2069 = vld [vmem:[#allocation2 + $0x40] sm:$0xff]
        %v2070 = vld [vmem:[#allocation2 + $0x48] sm:$0xff]
        %v2071 = vld [vmem:[#allocation2 + $0x50] sm:$0xff]
        %v2072 = vld [vmem:[#allocation2 + $0x58] sm:$0xff]
        %v2073 = vld [vmem:[#allocation2 + $0x60] sm:$0xff]
        %v2074 = vld [vmem:[#allocation2 + $0x68] sm:$0xff]
        %v2075 = vld [vmem:[#allocation2 + $0x70] sm:$0xff]
        %v2076 = vld [vmem:[#allocation2 + $0x78] sm:$0xff]
        %v2077 = vld [vmem:[#allocation2 + $0x80] sm:$0xff]
        %v2078 = vld [vmem:[#allocation2 + $0x88] sm:$0xff]
        %v2079 = vld [vmem:[#allocation2 + $0x90] sm:$0xff]
        %v2080 = vld [vmem:[#allocation2 + $0x98] sm:$0xff]
        %v2081 = vld [vmem:[#allocation2 + $0xa0] sm:$0xff]
        %v2082 = vld [vmem:[#allocation2 + $0xa8] sm:$0xff]
        %v2083 = vld [vmem:[#allocation2 + $0xb0] sm:$0xff]
        %v2084 = vld [vmem:[#allocation2 + $0xb8] sm:$0xff]
        %v2085 = vld [vmem:[#allocation2 + $0xc0] sm:$0xff]
        %v2086 = vld [vmem:[#allocation2 + $0xc8] sm:$0xff]
        %v2087 = vld [vmem:[#allocation2 + $0xd0] sm:$0xff]
        %v2088 = vld [vmem:[#allocation2 + $0xd8] sm:$0xff]
        %v2089 = vld [vmem:[#allocation2 + $0xe0] sm:$0xff]
        %v2090 = vld [vmem:[#allocation2 + $0xe8] sm:$0xff]
        %v2091 = vld [vmem:[#allocation2 + $0xf0] sm:$0xff]
        %v2092 = vld [vmem:[#allocation2 + $0xf8] sm:$0xff]
        %2093 = vmatpush.msra.mxu0 %v2076
        %2094 = vmatpush.msra.mxu0 %v2075
        %2095 = vmatpush.msra.mxu0 %v2074
        %2096 = vmatpush.msra.mxu0 %v2073
        %2097 = vmatpush.msra.mxu0 %v2072
        %2098 = vmatpush.msra.mxu0 %v2071
        %2099 = vmatpush.msra.mxu0 %v2070
        %2100 = vmatpush.msra.mxu0 %v2069
        %2101 = vmatpush.msra.mxu0 %v2068
        %2102 = vmatpush.msra.mxu0 %v2067
        %2103 = vmatpush.msra.mxu0 %v2066
        %2104 = vmatpush.msra.mxu0 %v2065
        %2105 = vmatpush.msra.mxu0 %v2064
        %2106 = vmatpush.msra.mxu0 %v2063
        %2107 = vmatpush.msra.mxu0 %v2062
        %2108 = vmatpush.msra.mxu0 %v2061
        %2109 = vmatmul.f32.gmra.mxu0 %v2058
        %v2110 = vpop.f32.mrf.mxu0
        %v2111 = vadd.f32 0.0, %v2110
        %2112 = vdwg.mxu0
        %2113 = vmatpush.msra.mxu0 %v2092
        %2114 = vmatpush.msra.mxu0 %v2091
        %2115 = vmatpush.msra.mxu0 %v2090
        %2116 = vmatpush.msra.mxu0 %v2089
        %2117 = vmatpush.msra.mxu0 %v2088
        %2118 = vmatpush.msra.mxu0 %v2087
        %2119 = vmatpush.msra.mxu0 %v2086
        %2120 = vmatpush.msra.mxu0 %v2085
        %2121 = vmatpush.msra.mxu0 %v2084
        %2122 = vmatpush.msra.mxu0 %v2083
        %2123 = vmatpush.msra.mxu0 %v2082
        %2124 = vmatpush.msra.mxu0 %v2081
        %2125 = vmatpush.msra.mxu0 %v2080
        %2126 = vmatpush.msra.mxu0 %v2079
        %2127 = vmatpush.msra.mxu0 %v2078
        %2128 = vmatpush.msra.mxu0 %v2077
        %2129 = vmatmul.f32.gmra.mxu0 %v2059
        %v2130 = vpop.f32.mrf.mxu0
        %v2131 = vadd.f32 %v2111, %v2130
        %2132 = vdwg.mxu0
        %v2133 = vadd.f32 %v2060, %v2131
        %2134 = vst [vmem:[%s346] sm:$0xff] %v2133
        %s2135 = sand.u32 %s217, 1
        %s2136 = scalar_lea.sflag [#allocation5], %s2135
        %s2137 = sand.u32 %s217, 1
        %s2138 = smul.addr %s2137, 8
        %s2139 = scalar_lea.vmem [#allocation4], %s2138
        // Predicated region
        $region53: #{tpu_custom_call.1} parent=47 // pred_check
          %p2140 = pneg %p227
        $region54: #{tpu_custom_call.1} parent=47 // pred_check_branch
          %2142 = sbr.rel (%p2140) target = $region56
        $region55: #{tpu_custom_call.1} parent=47 // pred_region
          %2144 = vsyncadd %s2136, 0
          %s2145 = smul.addr %s27, 8
          %s2146 = scalar_lea.hbm %s7, %s2145
          %s2148 = sshll.u32 %s2139, 4
          %s2149 = int_to_ptr.vmem [resolvable:$true] %s2148
          %s2150 = sshll.u32 %s2146, 4
          %s2151 = int_to_ptr.hbm [resolvable:$true] %s2150
          %2153 = dma.vmem_to_hbm [thread:$0]  %s2149, 128, %s2151, %s2136
        $region56: #{tpu_custom_call.1} parent=47 // pred_fallthru
          _
      $region48: #{tpu_custom_call.1} parent=5 // pred_fallthru
        _
      %p2154 = scmp.le.s32.totalorder 2, %s18
      // Predicated region
      $region57: #{tpu_custom_call.1} parent=5 // pred_check
        %p2155 = pneg %p2154
      $region58: #{tpu_custom_call.1} parent=5 // pred_check_branch
        %2157 = sbr.rel (%p2155) target = $region60
      $region59: #{tpu_custom_call.1} parent=5 // pred_region
        %s2158 = ssub.s32 %s18, 2
        // Predicated region
        $region61: #{tpu_custom_call.1} parent=59 // pred_check
          %p2159 = pneg %p233
        $region62: #{tpu_custom_call.1} parent=59 // pred_check_branch
          %2161 = sbr.rel (%p2159) target = $region64
        $region63: #{tpu_custom_call.1} parent=59 // pred_region
          %s2162 = sand.u32 %s218, 1
          %s2163 = scalar_lea.sflag [#allocation5], %s2162
          %s2164 = sand.u32 %s218, 1
          %s2165 = smul.addr %s2164, 8
          %s2166 = scalar_lea.vmem [#allocation4], %s2165
          %2168 = dma.done %s2163, 128
        $region64: #{tpu_custom_call.1} parent=59 // pred_fallthru
          _
      $region60: #{tpu_custom_call.1} parent=5 // pred_fallthru
        _
    $region6: #{tpu_custom_call.1} parent=1 // loop_footer
      %s22 = sadd.s32 1, %s18
    $region7: #{tpu_custom_call.1} parent=1 // loop_footer_branch
      %17 = sbr.rel target = $region3
    $region8: #{tpu_custom_call.1} parent=1 // loop_exit
      _
    %2169 = vsyncpa [#allocation5], 1
    %s2170 = scalar_lea.sflag [#allocation5], 1
    %2171 = vsyncpa %s2170, 1

</llo_original>
